<compile_context>
chip_gen: v7x
topology: tpu7x:2x2x1
jax: 0.10.0
libtpu: 0.0.40
codegen_flags: <defaults>
</compile_context>

<pallas_src>
import functools

import jax
import jax.numpy as jnp
import numpy as np
from jax import lax
from jax.experimental import pallas as pl
from jax.experimental.pallas import tpu as pltpu


# --------------------------------------------------------------------------------------
# Resident kernel: whole A_hat^T lives in VMEM; all niter iterations in one invocation.
# --------------------------------------------------------------------------------------
def _ppr_resident_kernel(a_t_ref, local_t_ref, out_ref, *, alpha, niter, unroll):
    """a_t_ref: (N, N) bf16 = A_hat^T; local_t_ref: (C, N) f32; out_ref: (C, N) f32."""
    local_t = local_t_ref[...]
    alpha_local = alpha * local_t                  # hoisted out of the loop (VPU, once)

    def body(_, preds_t):
        # Read A from its VMEM ref inside the body: the MXU streams from VMEM either
        # way, and this avoids a loop-spanning full-A value / second VMEM copy of A.
        return (
            jnp.dot(preds_t.astype(a_t_ref.dtype), a_t_ref[...],
                    preferred_element_type=jnp.float32)
            + alpha_local
        )

    preds_t = lax.fori_loop(0, niter, body, local_t, unroll=unroll)
    out_ref[...] = preds_t.astype(out_ref.dtype)


# --------------------------------------------------------------------------------------
# Streaming fallback: A_hat^T streamed in column tiles, preds^T ping-pongs in VMEM.
# --------------------------------------------------------------------------------------
def _ppr_stream_kernel(a_t_ref, local_t_ref, out_ref, pp_ref, *, alpha, col_tile):
    """grid = (niter, N // col_tile), both axes sequential ("arbitrary").

      a_t_ref    : (N, col_tile) bf16 column tile of A_hat^T
      local_t_ref: (C, N) f32 (whole, resident)
      out_ref    : (C, col_tile) f32 output column tile
      pp_ref     : (2, C, N) f32 ping-pong carry for preds^T (persists across grid steps)
    """
    it = pl.program_id(0)
    j = pl.program_id(1)

    @pl.when((it == 0) & (j == 0))
    def _():
        pp_ref[0, :, :] = local_t_ref[...]          # preds starts as local_preds

    src = it % 2
    col = pl.multiple_of(j * col_tile, col_tile)

    preds_t = pp_ref[src]                           # (C, N) f32, current iteration's preds
    new_tile = (
        jnp.dot(preds_t.astype(a_t_ref.dtype), a_t_ref[...],
                preferred_element_type=jnp.float32)
        + alpha * local_t_ref[:, pl.ds(col, col_tile)]
    )

    @pl.when(src == 0)
    def _():
        pp_ref[1, :, pl.ds(col, col_tile)] = new_tile

    @pl.when(src == 1)
    def _():
        pp_ref[0, :, pl.ds(col, col_tile)] = new_tile

    # Final HBM contents come from the last (it == niter-1) pass over each column tile.
    out_ref[...] = new_tile.astype(out_ref.dtype)


# --------------------------------------------------------------------------------------
# Wrapper
# --------------------------------------------------------------------------------------
def _vmem_budget_bytes():
    """Chip-aware usable VMEM: physical capacity minus ~15% headroom."""
    try:
        cap = int(pltpu.get_tpu_info().vmem_capacity_bytes)
    except Exception:
        cap = 64 << 20                               # conservative fallback (v7x-sized)
    return int(cap * 0.85)


def ppr_power_iteration(a_hat_scaled, local_preds, idx, *, alpha, niter,
                        force_stream=False, col_tile=None):
    """niter PPR propagation steps in Pallas; row gather (preds[idx]) stays in JAX."""
    n, c = local_preds.shape
    assert a_hat_scaled.shape == (n, n)
    alpha = float(alpha)
    niter = int(niter)

    local_f32 = local_preds.astype(jnp.float32)
    if niter == 0:
        return local_f32[idx]

    # Transposed domain: carry P^T (C, N); multiply by A_hat^T (== A_hat if symmetric).
    a_t_bf16 = a_hat_scaled.T.astype(jnp.bfloat16)   # (N, N)
    local_t = local_f32.T                            # (C, N)

    budget = _vmem_budget_bytes()

    # All residents of the whole-A design: A(bf16) + 4x (C,N) f32 (local^T, alpha*local^T,
    # carry, out) + bf16 cast temp of the carry; 25% + 2 MiB headroom for compiler scratch.
    resident_bytes = 2 * n * n + 4 * (4 * n * c) + 2 * n * c
    needed_resident = int(resident_bytes * 1.25) + (2 << 20)

    use_stream = force_stream or needed_resident > budget

    if not use_stream:
        unroll = n <= 1024       # full unroll only pays off when per-iter MXU work is tiny
        kernel = functools.partial(_ppr_resident_kernel,
                                   alpha=alpha, niter=niter, unroll=unroll)
        out_t = pl.pallas_call(
            kernel,
            out_shape=jax.ShapeDtypeStruct((c, n), jnp.float32),
            in_specs=[
                pl.BlockSpec(memory_space=pltpu.MemorySpace.VMEM),
                pl.BlockSpec(memory_space=pltpu.MemorySpace.VMEM),
            ],
            out_specs=pl.BlockSpec(memory_space=pltpu.MemorySpace.VMEM),
            compiler_params=pltpu.CompilerParams(
                vmem_limit_bytes=int(min(max(needed_resident, 16 << 20), budget))),
        )(a_t_bf16, local_t)
    else:
        if col_tile is None:
            col_tile = next((t for t in (512, 256, 128) if n % t == 0), n)
        assert n % col_tile == 0, "N must be divisible by the streaming column tile"
        n_tiles = n // col_tile

        stream_bytes = (2 * (n * col_tile * 2)       # A column tile, double-buffered
                        + 2 * (c * n * 4)            # local^T (resident; conservatively x2)
                        + 2 * (c * col_tile * 4)     # out tile, double-buffered
                        + 2 * c * n * 4              # ping-pong preds^T scratch
                        + 2 * c * n)                 # bf16 cast temp of the carry
        vmem_limit = int(min(max(int(stream_bytes * 1.25) + (2 << 20), 16 << 20), budget))

        kernel = functools.partial(_ppr_stream_kernel, alpha=alpha, col_tile=col_tile)
        out_t = pl.pallas_call(
            kernel,
            out_shape=jax.ShapeDtypeStruct((c, n), jnp.float32),
            grid_spec=pltpu.PrefetchScalarGridSpec(
                num_scalar_prefetch=0,
                grid=(niter, n_tiles),
                in_specs=[
                    pl.BlockSpec((n, col_tile), lambda it, j: (0, j)),
                    pl.BlockSpec((c, n), lambda it, j: (0, 0)),
                ],
                out_specs=pl.BlockSpec((c, col_tile), lambda it, j: (0, j)),
                scratch_shapes=[pltpu.VMEM((2, c, n), jnp.float32)],
            ),
            compiler_params=pltpu.CompilerParams(
                dimension_semantics=("arbitrary", "arbitrary"),
                vmem_limit_bytes=vmem_limit),
        )(a_t_bf16, local_t)

    # Back to node-major and gather the requested rows (cheap JAX glue).
    return out_t.T[idx]


def calc_a_hat_dense(adj: np.ndarray) -> np.ndarray:
    """Dense equivalent of calc_A_hat: D^{-1/2} (A + I) D^{-1/2}."""
    nnodes = adj.shape[0]
    a = adj + np.eye(nnodes, dtype=adj.dtype)
    d_vec = a.sum(axis=1)
    d_invsqrt = 1.0 / np.sqrt(d_vec)
    return (d_invsqrt[:, None] * a) * d_invsqrt[None, :]


if __name__ == "__main__":
    # Small, deterministic synthetic problem.
    N = 256        # number of graph nodes (multiple of 256 -> lane-dense transposed output)
    C = 128        # number of classes
    ALPHA = 0.1
    NITER = 10
    # drop_prob is None -> dropout is identity (matches the PyTorch default branch).

    key = jax.random.PRNGKey(0)
    k_adj, k_preds, k_idx = jax.random.split(key, 3)

    # Deterministic symmetric 0/1 adjacency (no self loops; calc_A_hat adds I).
    upper = (jax.random.uniform(k_adj, (N, N)) < 0.05).astype(jnp.float32)
    upper = jnp.triu(upper, k=1)
    adj_np = np.asarray(upper + upper.T, dtype=np.float32)

    a_hat = calc_a_hat_dense(adj_np)                          # D^{-1/2}(A+I)D^{-1/2}
    a_hat_scaled = jnp.asarray((1.0 - ALPHA) * a_hat, dtype=jnp.float32)

    local_preds = jax.random.normal(k_preds, (N, C), dtype=jnp.float32)
    idx = jax.random.permutation(k_idx, N)[:64]               # gather 64 nodes

    # Main (resident) path.
    out = ppr_power_iteration(a_hat_scaled, local_preds, idx, alpha=ALPHA, niter=NITER)
    out = jax.block_until_ready(out)

    # Also exercise the streaming fallback (forced, multi-tile + ping-pong carry).
    out_stream = ppr_power_iteration(a_hat_scaled, local_preds, idx,
                                     alpha=ALPHA, niter=NITER,
                                     force_stream=True, col_tile=128)
    out_stream = jax.block_until_ready(out_stream)

    # Reference 1 (tight): same transposed bf16-A / f32-accumulate recipe in pure JAX.
    a_t_bf16 = a_hat_scaled.T.astype(jnp.bfloat16)
    preds_t = local_preds.T.astype(jnp.float32)
    alpha_local_t = ALPHA * preds_t
    for _ in range(NITER):
        preds_t = jnp.dot(preds_t.astype(jnp.bfloat16), a_t_bf16,
                          preferred_element_type=jnp.float32) + alpha_local_t
    ref_mp = preds_t.T[idx]
    np.testing.assert_allclose(np.asarray(out), np.asarray(ref_mp), rtol=2e-3, atol=2e-3)
    np.testing.assert_allclose(np.asarray(out_stream), np.asarray(ref_mp),
                               rtol=2e-3, atol=2e-3)

    # Reference 2 (loose sanity): full-f32 reference; tolerance loosened for bf16 A.
    preds_f32 = local_preds
    for _ in range(NITER):
        preds_f32 = a_hat_scaled @ preds_f32 + ALPHA * local_preds
    ref_f32 = preds_f32[idx]
    np.testing.assert_allclose(np.asarray(out), np.asarray(ref_f32), rtol=1e-1, atol=1e-1)

    print("KERNEL_OK")
</pallas_src>

<mosaic_0001>
module attributes {stable_mosaic.version = 11 : i64} {
  func.func @_ppr_resident_kernel(%arg0: memref<256x256xbf16, #tpu.memory_space<vmem>>, %arg1: memref<128x256xf32, #tpu.memory_space<vmem>>, %arg2: memref<128x256xf32, #tpu.memory_space<vmem>>) attributes {dimension_semantics = [], scalar_prefetch = 0 : i64, scratch_operands = 0 : i64, tpu.core_type = #tpu.core_type<tc>} {
    %c0 = arith.constant 0 : index
    %c0_0 = arith.constant 0 : index
    %0 = vector.load %arg1[%c0, %c0_0] : memref<128x256xf32, #tpu.memory_space<vmem>>, vector<128x256xf32>
    %cst = arith.constant 1.000000e-01 : f32
    %1 = vector.broadcast %cst : f32 to vector<128x256xf32>
    %2 = arith.mulf %1, %0 : vector<128x256xf32>
    %c0_i32 = arith.constant 0 : i32
    %3 = arith.truncf %0 : vector<128x256xf32> to vector<128x256xbf16>
    %c0_1 = arith.constant 0 : index
    %c0_2 = arith.constant 0 : index
    %4 = vector.load %arg0[%c0_1, %c0_2] : memref<256x256xbf16, #tpu.memory_space<vmem>>, vector<256x256xbf16>
    %cst_3 = arith.constant dense<0.000000e+00> : vector<128x256xf32>
    %5 = tpu.matmul %3, %4, %cst_3 {dimension_numbers = #tpu.dot_dimension_numbers<[1], [0], [0], [1], [0, 0, 1, 1], [], []>} : vector<128x256xbf16>, vector<256x256xbf16>, vector<128x256xf32> -> vector<128x256xf32>
    %6 = arith.addf %5, %2 : vector<128x256xf32>
    %c1_i32 = arith.constant 1 : i32
    %7 = arith.truncf %6 : vector<128x256xf32> to vector<128x256xbf16>
    %c0_4 = arith.constant 0 : index
    %c0_5 = arith.constant 0 : index
    %8 = vector.load %arg0[%c0_4, %c0_5] : memref<256x256xbf16, #tpu.memory_space<vmem>>, vector<256x256xbf16>
    %cst_6 = arith.constant dense<0.000000e+00> : vector<128x256xf32>
    %9 = tpu.matmul %7, %8, %cst_6 {dimension_numbers = #tpu.dot_dimension_numbers<[1], [0], [0], [1], [0, 0, 1, 1], [], []>} : vector<128x256xbf16>, vector<256x256xbf16>, vector<128x256xf32> -> vector<128x256xf32>
    %10 = arith.addf %9, %2 : vector<128x256xf32>
    %c2_i32 = arith.constant 2 : i32
    %11 = arith.truncf %10 : vector<128x256xf32> to vector<128x256xbf16>
    %c0_7 = arith.constant 0 : index
    %c0_8 = arith.constant 0 : index
    %12 = vector.load %arg0[%c0_7, %c0_8] : memref<256x256xbf16, #tpu.memory_space<vmem>>, vector<256x256xbf16>
    %cst_9 = arith.constant dense<0.000000e+00> : vector<128x256xf32>
    %13 = tpu.matmul %11, %12, %cst_9 {dimension_numbers = #tpu.dot_dimension_numbers<[1], [0], [0], [1], [0, 0, 1, 1], [], []>} : vector<128x256xbf16>, vector<256x256xbf16>, vector<128x256xf32> -> vector<128x256xf32>
    %14 = arith.addf %13, %2 : vector<128x256xf32>
    %c3_i32 = arith.constant 3 : i32
    %15 = arith.truncf %14 : vector<128x256xf32> to vector<128x256xbf16>
    %c0_10 = arith.constant 0 : index
    %c0_11 = arith.constant 0 : index
    %16 = vector.load %arg0[%c0_10, %c0_11] : memref<256x256xbf16, #tpu.memory_space<vmem>>, vector<256x256xbf16>
    %cst_12 = arith.constant dense<0.000000e+00> : vector<128x256xf32>
    %17 = tpu.matmul %15, %16, %cst_12 {dimension_numbers = #tpu.dot_dimension_numbers<[1], [0], [0], [1], [0, 0, 1, 1], [], []>} : vector<128x256xbf16>, vector<256x256xbf16>, vector<128x256xf32> -> vector<128x256xf32>
    %18 = arith.addf %17, %2 : vector<128x256xf32>
    %c4_i32 = arith.constant 4 : i32
    %19 = arith.truncf %18 : vector<128x256xf32> to vector<128x256xbf16>
    %c0_13 = arith.constant 0 : index
    %c0_14 = arith.constant 0 : index
    %20 = vector.load %arg0[%c0_13, %c0_14] : memref<256x256xbf16, #tpu.memory_space<vmem>>, vector<256x256xbf16>
    %cst_15 = arith.constant dense<0.000000e+00> : vector<128x256xf32>
    %21 = tpu.matmul %19, %20, %cst_15 {dimension_numbers = #tpu.dot_dimension_numbers<[1], [0], [0], [1], [0, 0, 1, 1], [], []>} : vector<128x256xbf16>, vector<256x256xbf16>, vector<128x256xf32> -> vector<128x256xf32>
    %22 = arith.addf %21, %2 : vector<128x256xf32>
    %c5_i32 = arith.constant 5 : i32
    %23 = arith.truncf %22 : vector<128x256xf32> to vector<128x256xbf16>
    %c0_16 = arith.constant 0 : index
    %c0_17 = arith.constant 0 : index
    %24 = vector.load %arg0[%c0_16, %c0_17] : memref<256x256xbf16, #tpu.memory_space<vmem>>, vector<256x256xbf16>
    %cst_18 = arith.constant dense<0.000000e+00> : vector<128x256xf32>
    %25 = tpu.matmul %23, %24, %cst_18 {dimension_numbers = #tpu.dot_dimension_numbers<[1], [0], [0], [1], [0, 0, 1, 1], [], []>} : vector<128x256xbf16>, vector<256x256xbf16>, vector<128x256xf32> -> vector<128x256xf32>
    %26 = arith.addf %25, %2 : vector<128x256xf32>
    %c6_i32 = arith.constant 6 : i32
    %27 = arith.truncf %26 : vector<128x256xf32> to vector<128x256xbf16>
    %c0_19 = arith.constant 0 : index
    %c0_20 = arith.constant 0 : index
    %28 = vector.load %arg0[%c0_19, %c0_20] : memref<256x256xbf16, #tpu.memory_space<vmem>>, vector<256x256xbf16>
    %cst_21 = arith.constant dense<0.000000e+00> : vector<128x256xf32>
    %29 = tpu.matmul %27, %28, %cst_21 {dimension_numbers = #tpu.dot_dimension_numbers<[1], [0], [0], [1], [0, 0, 1, 1], [], []>} : vector<128x256xbf16>, vector<256x256xbf16>, vector<128x256xf32> -> vector<128x256xf32>
    %30 = arith.addf %29, %2 : vector<128x256xf32>
    %c7_i32 = arith.constant 7 : i32
    %31 = arith.truncf %30 : vector<128x256xf32> to vector<128x256xbf16>
    %c0_22 = arith.constant 0 : index
    %c0_23 = arith.constant 0 : index
    %32 = vector.load %arg0[%c0_22, %c0_23] : memref<256x256xbf16, #tpu.memory_space<vmem>>, vector<256x256xbf16>
    %cst_24 = arith.constant dense<0.000000e+00> : vector<128x256xf32>
    %33 = tpu.matmul %31, %32, %cst_24 {dimension_numbers = #tpu.dot_dimension_numbers<[1], [0], [0], [1], [0, 0, 1, 1], [], []>} : vector<128x256xbf16>, vector<256x256xbf16>, vector<128x256xf32> -> vector<128x256xf32>
    %34 = arith.addf %33, %2 : vector<128x256xf32>
    %c8_i32 = arith.constant 8 : i32
    %35 = arith.truncf %34 : vector<128x256xf32> to vector<128x256xbf16>
    %c0_25 = arith.constant 0 : index
    %c0_26 = arith.constant 0 : index
    %36 = vector.load %arg0[%c0_25, %c0_26] : memref<256x256xbf16, #tpu.memory_space<vmem>>, vector<256x256xbf16>
    %cst_27 = arith.constant dense<0.000000e+00> : vector<128x256xf32>
    %37 = tpu.matmul %35, %36, %cst_27 {dimension_numbers = #tpu.dot_dimension_numbers<[1], [0], [0], [1], [0, 0, 1, 1], [], []>} : vector<128x256xbf16>, vector<256x256xbf16>, vector<128x256xf32> -> vector<128x256xf32>
    %38 = arith.addf %37, %2 : vector<128x256xf32>
    %c9_i32 = arith.constant 9 : i32
    %39 = arith.truncf %38 : vector<128x256xf32> to vector<128x256xbf16>
    %c0_28 = arith.constant 0 : index
    %c0_29 = arith.constant 0 : index
    %40 = vector.load %arg0[%c0_28, %c0_29] : memref<256x256xbf16, #tpu.memory_space<vmem>>, vector<256x256xbf16>
    %cst_30 = arith.constant dense<0.000000e+00> : vector<128x256xf32>
    %41 = tpu.matmul %39, %40, %cst_30 {dimension_numbers = #tpu.dot_dimension_numbers<[1], [0], [0], [1], [0, 0, 1, 1], [], []>} : vector<128x256xbf16>, vector<256x256xbf16>, vector<128x256xf32> -> vector<128x256xf32>
    %42 = arith.addf %41, %2 : vector<128x256xf32>
    %c0_31 = arith.constant 0 : index
    %c0_32 = arith.constant 0 : index
    %43 = vector.load %arg2[%c0_31, %c0_32] : memref<128x256xf32, #tpu.memory_space<vmem>>, vector<128x256xf32>
    tpu.vector_store %arg2[%c0_31, %c0_32], %42 {strides = array<i32>} : memref<128x256xf32, #tpu.memory_space<vmem>>, vector<128x256xf32>,
    return
  }
}

</mosaic_0001>

<llo_original>
// kernel: tpu_custom_call.1
$region0: #{tpu_custom_call.1}
  #allocation0 [shape = 'u32[]', space=smem, size = 0x4, offset = 0x4, fixed_abs, tag = 'smem constant byte address 0x4 - core index']
  #allocation1 [shape = 'u32[144,128]{1,0:T(1,128)}', space=vmem, size = 0x12000, scoped, tag = 'internal scratch']
  %s0 = inlined_call_operand.hbm [shape: bf16[256,256], index: 0, kind: input, shape index: {}]
  %s1 = inlined_call_operand.hbm [shape: f32[128,256], index: 1, kind: input, shape index: {}]
  %s2 = inlined_call_operand.hbm [shape: f32[128,256], index: 2, kind: output, shape index: {}]
  %s3 = sld [smem:[#allocation0]]
  $region26: #{tpu_custom_call.1} parent=0
    _
  %s5 = ssub.s32 1, %s3
  %s6 = scalar_select 0, %s5, %s3
  $region1: #{tpu_custom_call.1} parent=0
    #allocation2 [shape = 'u8[131072]{0}', space=vmem, size = 0x20000, scoped, tag = 'input window, operand 0, single buffered']
    #allocation3 [shape = 's32[1]{0}', space=sflag, size = 0x4, scoped, tag = 'scoped memory for tpu_custom_call.1']
    #allocation4 [shape = 's32[1]{0}', space=sflag, size = 0x4, scoped, tag = 'scoped memory for tpu_custom_call.1']
    #allocation5 [shape = 'u8[131072]{0}', space=vmem, size = 0x20000, scoped, tag = 'input window, operand 1, single buffered']
    #allocation6 [shape = 's32[1]{0}', space=sflag, size = 0x4, scoped, tag = 'scoped memory for tpu_custom_call.1']
    #allocation7 [shape = 'u8[131072]{0}', space=vmem, size = 0x20000, scoped, tag = 'output window, operand 0, single buffered']
    %7 = vsyncpa [#allocation3], 0
    %8 = vsyncpa [#allocation6], 0
    %9 = vsyncpa [#allocation4], 0
    // Predicated region
    $region2: #{tpu_custom_call.1} parent=1 // pred_check
      _
    $region3: #{tpu_custom_call.1} parent=1 // pred_check_branch
      %11 = sbr.rel (0) target = $region5
    $region4: #{tpu_custom_call.1} parent=1 // pred_region
      %s13 = ssub.s32 4096, 4096
      %14 = vsyncadd [#allocation3], %s13
      %s15 = sshll.u32 [#allocation2], 4
      %s16 = int_to_ptr.vmem [resolvable:$true] %s15
      %21 = dma.hbm_to_vmem [thread:$0]  %s0, 4096, %s16, [#allocation3], 128, 128, 8
    $region5: #{tpu_custom_call.1} parent=1 // pred_fallthru
      _
    // Predicated region
    $region6: #{tpu_custom_call.1} parent=1 // pred_check
      _
    $region7: #{tpu_custom_call.1} parent=1 // pred_check_branch
      %23 = sbr.rel (0) target = $region9
    $region8: #{tpu_custom_call.1} parent=1 // pred_region
      %s25 = ssub.s32 4096, 4096
      %26 = vsyncadd [#allocation6], %s25
      %s27 = sshll.u32 [#allocation5], 4
      %s28 = int_to_ptr.vmem [resolvable:$true] %s27
      %33 = dma.hbm_to_vmem [thread:$0]  %s1, 4096, %s28, [#allocation6], 256, 256, 16
    $region9: #{tpu_custom_call.1} parent=1 // pred_fallthru
      _
    // Predicated region
    $region10: #{tpu_custom_call.1} parent=1 // pred_check
      _
    $region11: #{tpu_custom_call.1} parent=1 // pred_check_branch
      %35 = sbr.rel (0) target = $region13
    $region12: #{tpu_custom_call.1} parent=1 // pred_region
      %36 = dma.done [#allocation3], 4096
    $region13: #{tpu_custom_call.1} parent=1 // pred_fallthru
      _
    // Predicated region
    $region14: #{tpu_custom_call.1} parent=1 // pred_check
      _
    $region15: #{tpu_custom_call.1} parent=1 // pred_check_branch
      %38 = sbr.rel (0) target = $region17
    $region16: #{tpu_custom_call.1} parent=1 // pred_region
      %39 = dma.done [#allocation6], 4096
    $region17: #{tpu_custom_call.1} parent=1 // pred_fallthru
      _
    %v40 = vld [vmem:[#allocation5] sm:$0xff]
    %v41 = vld [vmem:[#allocation5 + $0x8] sm:$0xff]
    %v42 = vld [vmem:[#allocation5 + $0x10] sm:$0xff]
    %v43 = vld [vmem:[#allocation5 + $0x18] sm:$0xff]
    %v44 = vld [vmem:[#allocation5 + $0x20] sm:$0xff]
    %v45 = vld [vmem:[#allocation5 + $0x28] sm:$0xff]
    %v46 = vld [vmem:[#allocation5 + $0x30] sm:$0xff]
    %v47 = vld [vmem:[#allocation5 + $0x38] sm:$0xff]
    %v48 = vld [vmem:[#allocation5 + $0x40] sm:$0xff]
    %v49 = vld [vmem:[#allocation5 + $0x48] sm:$0xff]
    %v50 = vld [vmem:[#allocation5 + $0x50] sm:$0xff]
    %v51 = vld [vmem:[#allocation5 + $0x58] sm:$0xff]
    %v52 = vld [vmem:[#allocation5 + $0x60] sm:$0xff]
    %v53 = vld [vmem:[#allocation5 + $0x68] sm:$0xff]
    %v54 = vld [vmem:[#allocation5 + $0x70] sm:$0xff]
    %v55 = vld [vmem:[#allocation5 + $0x78] sm:$0xff]
    %v56 = vld [vmem:[#allocation5 + $0x80] sm:$0xff]
    %v57 = vld [vmem:[#allocation5 + $0x88] sm:$0xff]
    %v58 = vld [vmem:[#allocation5 + $0x90] sm:$0xff]
    %v59 = vld [vmem:[#allocation5 + $0x98] sm:$0xff]
    %v60 = vld [vmem:[#allocation5 + $0xa0] sm:$0xff]
    %v61 = vld [vmem:[#allocation5 + $0xa8] sm:$0xff]
    %v62 = vld [vmem:[#allocation5 + $0xb0] sm:$0xff]
    %v63 = vld [vmem:[#allocation5 + $0xb8] sm:$0xff]
    %v64 = vld [vmem:[#allocation5 + $0xc0] sm:$0xff]
    %v65 = vld [vmem:[#allocation5 + $0xc8] sm:$0xff]
    %v66 = vld [vmem:[#allocation5 + $0xd0] sm:$0xff]
    %v67 = vld [vmem:[#allocation5 + $0xd8] sm:$0xff]
    %v68 = vld [vmem:[#allocation5 + $0xe0] sm:$0xff]
    %v69 = vld [vmem:[#allocation5 + $0xe8] sm:$0xff]
    %v70 = vld [vmem:[#allocation5 + $0xf0] sm:$0xff]
    %v71 = vld [vmem:[#allocation5 + $0xf8] sm:$0xff]
    %v72 = vmul.f32 %v40, 0.1
    %v73 = vmul.f32 %v41, 0.1
    %v74 = vmul.f32 %v42, 0.1
    %v75 = vmul.f32 %v43, 0.1
    %v76 = vmul.f32 %v44, 0.1
    %v77 = vmul.f32 %v45, 0.1
    %v78 = vmul.f32 %v46, 0.1
    %v79 = vmul.f32 %v47, 0.1
    %v80 = vmul.f32 %v48, 0.1
    %v81 = vmul.f32 %v49, 0.1
    %v82 = vmul.f32 %v50, 0.1
    %v83 = vmul.f32 %v51, 0.1
    %v84 = vmul.f32 %v52, 0.1
    %v85 = vmul.f32 %v53, 0.1
    %v86 = vmul.f32 %v54, 0.1
    %v87 = vmul.f32 %v55, 0.1
    %v88 = vmul.f32 %v56, 0.1
    %v89 = vmul.f32 %v57, 0.1
    %v90 = vmul.f32 %v58, 0.1
    %v91 = vmul.f32 %v59, 0.1
    %v92 = vmul.f32 %v60, 0.1
    %v93 = vmul.f32 %v61, 0.1
    %v94 = vmul.f32 %v62, 0.1
    %v95 = vmul.f32 %v63, 0.1
    %v96 = vmul.f32 %v64, 0.1
    %v97 = vmul.f32 %v65, 0.1
    %v98 = vmul.f32 %v66, 0.1
    %v99 = vmul.f32 %v67, 0.1
    %v100 = vmul.f32 %v68, 0.1
    %v101 = vmul.f32 %v69, 0.1
    %v102 = vmul.f32 %v70, 0.1
    %v103 = vmul.f32 %v71, 0.1
    %v104 = vpack.c.bf16 %v42, %v40
    %v105 = vpack.c.bf16 %v43, %v41
    %v106 = vpack.c.bf16 %v46, %v44
    %v107 = vpack.c.bf16 %v47, %v45
    %v108 = vpack.c.bf16 %v50, %v48
    %v109 = vpack.c.bf16 %v51, %v49
    %v110 = vpack.c.bf16 %v54, %v52
    %v111 = vpack.c.bf16 %v55, %v53
    %v112 = vpack.c.bf16 %v58, %v56
    %v113 = vpack.c.bf16 %v59, %v57
    %v114 = vpack.c.bf16 %v62, %v60
    %v115 = vpack.c.bf16 %v63, %v61
    %v116 = vpack.c.bf16 %v66, %v64
    %v117 = vpack.c.bf16 %v67, %v65
    %v118 = vpack.c.bf16 %v70, %v68
    %v119 = vpack.c.bf16 %v71, %v69
    %v120 = vld [vmem:[#allocation2] sm:$0xff]
    %v121 = vld [vmem:[#allocation2 + $0x8] sm:$0xff]
    %v122 = vld [vmem:[#allocation2 + $0x10] sm:$0xff]
    %v123 = vld [vmem:[#allocation2 + $0x18] sm:$0xff]
    %v124 = vld [vmem:[#allocation2 + $0x20] sm:$0xff]
    %v125 = vld [vmem:[#allocation2 + $0x28] sm:$0xff]
    %v126 = vld [vmem:[#allocation2 + $0x30] sm:$0xff]
    %v127 = vld [vmem:[#allocation2 + $0x38] sm:$0xff]
    %v128 = vld [vmem:[#allocation2 + $0x40] sm:$0xff]
    %v129 = vld [vmem:[#allocation2 + $0x48] sm:$0xff]
    %v130 = vld [vmem:[#allocation2 + $0x50] sm:$0xff]
    %v131 = vld [vmem:[#allocation2 + $0x58] sm:$0xff]
    %v132 = vld [vmem:[#allocation2 + $0x60] sm:$0xff]
    %v133 = vld [vmem:[#allocation2 + $0x68] sm:$0xff]
    %v134 = vld [vmem:[#allocation2 + $0x70] sm:$0xff]
    %v135 = vld [vmem:[#allocation2 + $0x78] sm:$0xff]
    %v136 = vld [vmem:[#allocation2 + $0x80] sm:$0xff]
    %v137 = vld [vmem:[#allocation2 + $0x88] sm:$0xff]
    %v138 = vld [vmem:[#allocation2 + $0x90] sm:$0xff]
    %v139 = vld [vmem:[#allocation2 + $0x98] sm:$0xff]
    %v140 = vld [vmem:[#allocation2 + $0xa0] sm:$0xff]
    %v141 = vld [vmem:[#allocation2 + $0xa8] sm:$0xff]
    %v142 = vld [vmem:[#allocation2 + $0xb0] sm:$0xff]
    %v143 = vld [vmem:[#allocation2 + $0xb8] sm:$0xff]
    %v144 = vld [vmem:[#allocation2 + $0xc0] sm:$0xff]
    %v145 = vld [vmem:[#allocation2 + $0xc8] sm:$0xff]
    %v146 = vld [vmem:[#allocation2 + $0xd0] sm:$0xff]
    %v147 = vld [vmem:[#allocation2 + $0xd8] sm:$0xff]
    %v148 = vld [vmem:[#allocation2 + $0xe0] sm:$0xff]
    %v149 = vld [vmem:[#allocation2 + $0xe8] sm:$0xff]
    %v150 = vld [vmem:[#allocation2 + $0xf0] sm:$0xff]
    %v151 = vld [vmem:[#allocation2 + $0xf8] sm:$0xff]
    %v184 = vunpack.c.l.b16 %v120
    %v185 = vunpack.c.h.b16 %v120
    %v186 = vunpack.c.l.b16 %v121
    %v187 = vunpack.c.h.b16 %v121
    %v188 = vunpack.c.l.b16 %v122
    %v189 = vunpack.c.h.b16 %v122
    %v190 = vunpack.c.l.b16 %v123
    %v191 = vunpack.c.h.b16 %v123
    %v192 = vunpack.c.l.b16 %v124
    %v193 = vunpack.c.h.b16 %v124
    %v194 = vunpack.c.l.b16 %v125
    %v195 = vunpack.c.h.b16 %v125
    %v196 = vunpack.c.l.b16 %v126
    %v197 = vunpack.c.h.b16 %v126
    %v198 = vunpack.c.l.b16 %v127
    %v199 = vunpack.c.h.b16 %v127
    %v200 = vunpack.c.l.b16 %v128
    %v201 = vunpack.c.h.b16 %v128
    %v202 = vunpack.c.l.b16 %v129
    %v203 = vunpack.c.h.b16 %v129
    %v204 = vunpack.c.l.b16 %v130
    %v205 = vunpack.c.h.b16 %v130
    %v206 = vunpack.c.l.b16 %v131
    %v207 = vunpack.c.h.b16 %v131
    %v208 = vunpack.c.l.b16 %v132
    %v209 = vunpack.c.h.b16 %v132
    %v210 = vunpack.c.l.b16 %v133
    %v211 = vunpack.c.h.b16 %v133
    %v212 = vunpack.c.l.b16 %v134
    %v213 = vunpack.c.h.b16 %v134
    %v214 = vunpack.c.l.b16 %v135
    %v215 = vunpack.c.h.b16 %v135
    %v216 = vunpack.c.l.b16 %v136
    %v217 = vunpack.c.h.b16 %v136
    %v218 = vunpack.c.l.b16 %v137
    %v219 = vunpack.c.h.b16 %v137
    %v220 = vunpack.c.l.b16 %v138
    %v221 = vunpack.c.h.b16 %v138
    %v222 = vunpack.c.l.b16 %v139
    %v223 = vunpack.c.h.b16 %v139
    %v224 = vunpack.c.l.b16 %v140
    %v225 = vunpack.c.h.b16 %v140
    %v226 = vunpack.c.l.b16 %v141
    %v227 = vunpack.c.h.b16 %v141
    %v228 = vunpack.c.l.b16 %v142
    %v229 = vunpack.c.h.b16 %v142
    %v230 = vunpack.c.l.b16 %v143
    %v231 = vunpack.c.h.b16 %v143
    %v232 = vunpack.c.l.b16 %v144
    %v233 = vunpack.c.h.b16 %v144
    %v234 = vunpack.c.l.b16 %v145
    %v235 = vunpack.c.h.b16 %v145
    %v236 = vunpack.c.l.b16 %v146
    %v237 = vunpack.c.h.b16 %v146
    %v238 = vunpack.c.l.b16 %v147
    %v239 = vunpack.c.h.b16 %v147
    %v240 = vunpack.c.l.b16 %v148
    %v241 = vunpack.c.h.b16 %v148
    %v242 = vunpack.c.l.b16 %v149
    %v243 = vunpack.c.h.b16 %v149
    %v244 = vunpack.c.l.b16 %v150
    %v245 = vunpack.c.h.b16 %v150
    %v246 = vunpack.c.l.b16 %v151
    %v247 = vunpack.c.h.b16 %v151
    %v248 = vpack.c.b16 %v186, %v184
    %v249 = vpack.c.b16 %v187, %v185
    %v250 = vpack.c.b16 %v190, %v188
    %v251 = vpack.c.b16 %v191, %v189
    %v252 = vpack.c.b16 %v194, %v192
    %v253 = vpack.c.b16 %v195, %v193
    %v254 = vpack.c.b16 %v198, %v196
    %v255 = vpack.c.b16 %v199, %v197
    %v256 = vpack.c.b16 %v202, %v200
    %v257 = vpack.c.b16 %v203, %v201
    %v258 = vpack.c.b16 %v206, %v204
    %v259 = vpack.c.b16 %v207, %v205
    %v260 = vpack.c.b16 %v210, %v208
    %v261 = vpack.c.b16 %v211, %v209
    %v262 = vpack.c.b16 %v214, %v212
    %v263 = vpack.c.b16 %v215, %v213
    %v264 = vpack.c.b16 %v218, %v216
    %v265 = vpack.c.b16 %v219, %v217
    %v266 = vpack.c.b16 %v222, %v220
    %v267 = vpack.c.b16 %v223, %v221
    %v268 = vpack.c.b16 %v226, %v224
    %v269 = vpack.c.b16 %v227, %v225
    %v270 = vpack.c.b16 %v230, %v228
    %v271 = vpack.c.b16 %v231, %v229
    %v272 = vpack.c.b16 %v234, %v232
    %v273 = vpack.c.b16 %v235, %v233
    %v274 = vpack.c.b16 %v238, %v236
    %v275 = vpack.c.b16 %v239, %v237
    %v276 = vpack.c.b16 %v242, %v240
    %v277 = vpack.c.b16 %v243, %v241
    %v278 = vpack.c.b16 %v246, %v244
    %v279 = vpack.c.b16 %v247, %v245
    %312 = vmatprep.subr.bf16.mxu0 %v249
    %313 = vmatpush1.bf16.msra.mxu0 %v248
    %314 = vmatprep.subr.bf16.mxu0 %v251
    %315 = vmatpush1.bf16.msra.mxu0 %v250
    %316 = vmatprep.subr.bf16.mxu0 %v253
    %317 = vmatpush1.bf16.msra.mxu0 %v252
    %318 = vmatprep.subr.bf16.mxu0 %v255
    %319 = vmatpush1.bf16.msra.mxu0 %v254
    %320 = vmatprep.subr.bf16.mxu0 %v257
    %321 = vmatpush1.bf16.msra.mxu0 %v256
    %322 = vmatprep.subr.bf16.mxu0 %v259
    %323 = vmatpush1.bf16.msra.mxu0 %v258
    %324 = vmatprep.subr.bf16.mxu0 %v261
    %325 = vmatpush1.bf16.msra.mxu0 %v260
    %326 = vmatprep.subr.bf16.mxu0 %v263
    %327 = vmatpush1.bf16.msra.mxu0 %v262
    %328 = vmatprep.subr.bf16.mxu0 %v265
    %329 = vmatpush1.bf16.msra.mxu0 %v264
    %330 = vmatprep.subr.bf16.mxu0 %v267
    %331 = vmatpush1.bf16.msra.mxu0 %v266
    %332 = vmatprep.subr.bf16.mxu0 %v269
    %333 = vmatpush1.bf16.msra.mxu0 %v268
    %334 = vmatprep.subr.bf16.mxu0 %v271
    %335 = vmatpush1.bf16.msra.mxu0 %v270
    %336 = vmatprep.subr.bf16.mxu0 %v273
    %337 = vmatpush1.bf16.msra.mxu0 %v272
    %338 = vmatprep.subr.bf16.mxu0 %v275
    %339 = vmatpush1.bf16.msra.mxu0 %v274
    %340 = vmatprep.subr.bf16.mxu0 %v277
    %341 = vmatpush1.bf16.msra.mxu0 %v276
    %342 = vmatprep.subr.bf16.mxu0 %v279
    %343 = vmatpush1.bf16.msra.mxu0 %v278
    %344 = vmatprep.mubr.bf16.mxu0 %v105
    %345 = vmatmul.mubr.bf16.gmra.mrb[0].mxu0 %v104
    %v346 = vpop.f32.mrb[0].mxu0
    %v347 = vadd.f32 %v72, %v346
    %v348 = vpop.f32.mrb[0].mxu0
    %v349 = vadd.f32 %v73, %v348
    %v350 = vpop.f32.mrb[0].mxu0
    %v351 = vadd.f32 %v74, %v350
    %v352 = vpop.f32.mrb[0].mxu0
    %v353 = vadd.f32 %v75, %v352
    %354 = vmatprep.mubr.bf16.mxu0 %v107
    %355 = vmatmul.mubr.bf16.gmra.mrb[0].mxu0 %v106
    %v356 = vpop.f32.mrb[0].mxu0
    %v357 = vadd.f32 %v76, %v356
    %v358 = vpop.f32.mrb[0].mxu0
    %v359 = vadd.f32 %v77, %v358
    %v360 = vpop.f32.mrb[0].mxu0
    %v361 = vadd.f32 %v78, %v360
    %v362 = vpop.f32.mrb[0].mxu0
    %v363 = vadd.f32 %v79, %v362
    %364 = vmatprep.mubr.bf16.mxu0 %v109
    %365 = vmatmul.mubr.bf16.gmra.mrb[0].mxu0 %v108
    %v366 = vpop.f32.mrb[0].mxu0
    %v367 = vadd.f32 %v80, %v366
    %v368 = vpop.f32.mrb[0].mxu0
    %v369 = vadd.f32 %v81, %v368
    %v370 = vpop.f32.mrb[0].mxu0
    %v371 = vadd.f32 %v82, %v370
    %v372 = vpop.f32.mrb[0].mxu0
    %v373 = vadd.f32 %v83, %v372
    %374 = vmatprep.mubr.bf16.mxu0 %v111
    %375 = vmatmul.mubr.bf16.gmra.mrb[0].mxu0 %v110
    %v376 = vpop.f32.mrb[0].mxu0
    %v377 = vadd.f32 %v84, %v376
    %v378 = vpop.f32.mrb[0].mxu0
    %v379 = vadd.f32 %v85, %v378
    %v380 = vpop.f32.mrb[0].mxu0
    %v381 = vadd.f32 %v86, %v380
    %v382 = vpop.f32.mrb[0].mxu0
    %v383 = vadd.f32 %v87, %v382
    %384 = vmatprep.mubr.bf16.mxu0 %v113
    %385 = vmatmul.mubr.bf16.gmra.mrb[0].mxu0 %v112
    %v386 = vpop.f32.mrb[0].mxu0
    %v387 = vadd.f32 %v88, %v386
    %v388 = vpop.f32.mrb[0].mxu0
    %v389 = vadd.f32 %v89, %v388
    %v390 = vpop.f32.mrb[0].mxu0
    %v391 = vadd.f32 %v90, %v390
    %v392 = vpop.f32.mrb[0].mxu0
    %v393 = vadd.f32 %v91, %v392
    %394 = vmatprep.mubr.bf16.mxu0 %v115
    %395 = vmatmul.mubr.bf16.gmra.mrb[0].mxu0 %v114
    %v396 = vpop.f32.mrb[0].mxu0
    %v397 = vadd.f32 %v92, %v396
    %v398 = vpop.f32.mrb[0].mxu0
    %v399 = vadd.f32 %v93, %v398
    %v400 = vpop.f32.mrb[0].mxu0
    %v401 = vadd.f32 %v94, %v400
    %v402 = vpop.f32.mrb[0].mxu0
    %v403 = vadd.f32 %v95, %v402
    %404 = vmatprep.mubr.bf16.mxu0 %v117
    %405 = vmatmul.mubr.bf16.gmra.mrb[0].mxu0 %v116
    %v406 = vpop.f32.mrb[0].mxu0
    %v407 = vadd.f32 %v96, %v406
    %v408 = vpop.f32.mrb[0].mxu0
    %v409 = vadd.f32 %v97, %v408
    %v410 = vpop.f32.mrb[0].mxu0
    %v411 = vadd.f32 %v98, %v410
    %v412 = vpop.f32.mrb[0].mxu0
    %v413 = vadd.f32 %v99, %v412
    %414 = vmatprep.mubr.bf16.mxu0 %v119
    %415 = vmatmul.mubr.bf16.gmra.mrb[0].mxu0 %v118
    %v416 = vpop.f32.mrb[0].mxu0
    %v417 = vadd.f32 %v100, %v416
    %v418 = vpop.f32.mrb[0].mxu0
    %v419 = vadd.f32 %v101, %v418
    %v420 = vpop.f32.mrb[0].mxu0
    %v421 = vadd.f32 %v102, %v420
    %v422 = vpop.f32.mrb[0].mxu0
    %v423 = vadd.f32 %v103, %v422
    %424 = vdwg.mxu0
    %v425 = vpack.c.bf16 %v351, %v347
    %v426 = vpack.c.bf16 %v353, %v349
    %v427 = vpack.c.bf16 %v361, %v357
    %v428 = vpack.c.bf16 %v363, %v359
    %v429 = vpack.c.bf16 %v371, %v367
    %v430 = vpack.c.bf16 %v373, %v369
    %v431 = vpack.c.bf16 %v381, %v377
    %v432 = vpack.c.bf16 %v383, %v379
    %v433 = vpack.c.bf16 %v391, %v387
    %v434 = vpack.c.bf16 %v393, %v389
    %v435 = vpack.c.bf16 %v401, %v397
    %v436 = vpack.c.bf16 %v403, %v399
    %v437 = vpack.c.bf16 %v411, %v407
    %v438 = vpack.c.bf16 %v413, %v409
    %v439 = vpack.c.bf16 %v421, %v417
    %v440 = vpack.c.bf16 %v423, %v419
    %441 = vmatprep.subr.bf16.mxu0 %v249
    %442 = vmatpush1.bf16.msra.mxu0 %v248
    %443 = vmatprep.subr.bf16.mxu0 %v251
    %444 = vmatpush1.bf16.msra.mxu0 %v250
    %445 = vmatprep.subr.bf16.mxu0 %v253
    %446 = vmatpush1.bf16.msra.mxu0 %v252
    %447 = vmatprep.subr.bf16.mxu0 %v255
    %448 = vmatpush1.bf16.msra.mxu0 %v254
    %449 = vmatprep.subr.bf16.mxu0 %v257
    %450 = vmatpush1.bf16.msra.mxu0 %v256
    %451 = vmatprep.subr.bf16.mxu0 %v259
    %452 = vmatpush1.bf16.msra.mxu0 %v258
    %453 = vmatprep.subr.bf16.mxu0 %v261
    %454 = vmatpush1.bf16.msra.mxu0 %v260
    %455 = vmatprep.subr.bf16.mxu0 %v263
    %456 = vmatpush1.bf16.msra.mxu0 %v262
    %457 = vmatprep.subr.bf16.mxu0 %v265
    %458 = vmatpush1.bf16.msra.mxu0 %v264
    %459 = vmatprep.subr.bf16.mxu0 %v267
    %460 = vmatpush1.bf16.msra.mxu0 %v266
    %461 = vmatprep.subr.bf16.mxu0 %v269
    %462 = vmatpush1.bf16.msra.mxu0 %v268
    %463 = vmatprep.subr.bf16.mxu0 %v271
    %464 = vmatpush1.bf16.msra.mxu0 %v270
    %465 = vmatprep.subr.bf16.mxu0 %v273
    %466 = vmatpush1.bf16.msra.mxu0 %v272
    %467 = vmatprep.subr.bf16.mxu0 %v275
    %468 = vmatpush1.bf16.msra.mxu0 %v274
    %469 = vmatprep.subr.bf16.mxu0 %v277
    %470 = vmatpush1.bf16.msra.mxu0 %v276
    %471 = vmatprep.subr.bf16.mxu0 %v279
    %472 = vmatpush1.bf16.msra.mxu0 %v278
    %473 = vmatprep.mubr.bf16.mxu0 %v426
    %474 = vmatmul.mubr.bf16.gmra.mrb[0].mxu0 %v425
    %v475 = vpop.f32.mrb[0].mxu0
    %v476 = vadd.f32 %v72, %v475
    %v477 = vpop.f32.mrb[0].mxu0
    %v478 = vadd.f32 %v73, %v477
    %v479 = vpop.f32.mrb[0].mxu0
    %v480 = vadd.f32 %v74, %v479
    %v481 = vpop.f32.mrb[0].mxu0
    %v482 = vadd.f32 %v75, %v481
    %483 = vmatprep.mubr.bf16.mxu0 %v428
    %484 = vmatmul.mubr.bf16.gmra.mrb[0].mxu0 %v427
    %v485 = vpop.f32.mrb[0].mxu0
    %v486 = vadd.f32 %v76, %v485
    %v487 = vpop.f32.mrb[0].mxu0
    %v488 = vadd.f32 %v77, %v487
    %v489 = vpop.f32.mrb[0].mxu0
    %v490 = vadd.f32 %v78, %v489
    %v491 = vpop.f32.mrb[0].mxu0
    %v492 = vadd.f32 %v79, %v491
    %493 = vmatprep.mubr.bf16.mxu0 %v430
    %494 = vmatmul.mubr.bf16.gmra.mrb[0].mxu0 %v429
    %v495 = vpop.f32.mrb[0].mxu0
    %v496 = vadd.f32 %v80, %v495
    %v497 = vpop.f32.mrb[0].mxu0
    %v498 = vadd.f32 %v81, %v497
    %v499 = vpop.f32.mrb[0].mxu0
    %v500 = vadd.f32 %v82, %v499
    %v501 = vpop.f32.mrb[0].mxu0
    %v502 = vadd.f32 %v83, %v501
    %503 = vmatprep.mubr.bf16.mxu0 %v432
    %504 = vmatmul.mubr.bf16.gmra.mrb[0].mxu0 %v431
    %v505 = vpop.f32.mrb[0].mxu0
    %v506 = vadd.f32 %v84, %v505
    %v507 = vpop.f32.mrb[0].mxu0
    %v508 = vadd.f32 %v85, %v507
    %v509 = vpop.f32.mrb[0].mxu0
    %v510 = vadd.f32 %v86, %v509
    %v511 = vpop.f32.mrb[0].mxu0
    %v512 = vadd.f32 %v87, %v511
    %513 = vmatprep.mubr.bf16.mxu0 %v434
    %514 = vmatmul.mubr.bf16.gmra.mrb[0].mxu0 %v433
    %v515 = vpop.f32.mrb[0].mxu0
    %v516 = vadd.f32 %v88, %v515
    %v517 = vpop.f32.mrb[0].mxu0
    %v518 = vadd.f32 %v89, %v517
    %v519 = vpop.f32.mrb[0].mxu0
    %v520 = vadd.f32 %v90, %v519
    %v521 = vpop.f32.mrb[0].mxu0
    %v522 = vadd.f32 %v91, %v521
    %523 = vmatprep.mubr.bf16.mxu0 %v436
    %524 = vmatmul.mubr.bf16.gmra.mrb[0].mxu0 %v435
    %v525 = vpop.f32.mrb[0].mxu0
    %v526 = vadd.f32 %v92, %v525
    %v527 = vpop.f32.mrb[0].mxu0
    %v528 = vadd.f32 %v93, %v527
    %v529 = vpop.f32.mrb[0].mxu0
    %v530 = vadd.f32 %v94, %v529
    %v531 = vpop.f32.mrb[0].mxu0
    %v532 = vadd.f32 %v95, %v531
    %533 = vmatprep.mubr.bf16.mxu0 %v438
    %534 = vmatmul.mubr.bf16.gmra.mrb[0].mxu0 %v437
    %v535 = vpop.f32.mrb[0].mxu0
    %v536 = vadd.f32 %v96, %v535
    %v537 = vpop.f32.mrb[0].mxu0
    %v538 = vadd.f32 %v97, %v537
    %v539 = vpop.f32.mrb[0].mxu0
    %v540 = vadd.f32 %v98, %v539
    %v541 = vpop.f32.mrb[0].mxu0
    %v542 = vadd.f32 %v99, %v541
    %543 = vmatprep.mubr.bf16.mxu0 %v440
    %544 = vmatmul.mubr.bf16.gmra.mrb[0].mxu0 %v439
    %v545 = vpop.f32.mrb[0].mxu0
    %v546 = vadd.f32 %v100, %v545
    %v547 = vpop.f32.mrb[0].mxu0
    %v548 = vadd.f32 %v101, %v547
    %v549 = vpop.f32.mrb[0].mxu0
    %v550 = vadd.f32 %v102, %v549
    %v551 = vpop.f32.mrb[0].mxu0
    %v552 = vadd.f32 %v103, %v551
    %553 = vdwg.mxu0
    %v554 = vpack.c.bf16 %v480, %v476
    %v555 = vpack.c.bf16 %v482, %v478
    %v556 = vpack.c.bf16 %v490, %v486
    %v557 = vpack.c.bf16 %v492, %v488
    %v558 = vpack.c.bf16 %v500, %v496
    %v559 = vpack.c.bf16 %v502, %v498
    %v560 = vpack.c.bf16 %v510, %v506
    %v561 = vpack.c.bf16 %v512, %v508
    %v562 = vpack.c.bf16 %v520, %v516
    %v563 = vpack.c.bf16 %v522, %v518
    %v564 = vpack.c.bf16 %v530, %v526
    %v565 = vpack.c.bf16 %v532, %v528
    %v566 = vpack.c.bf16 %v540, %v536
    %v567 = vpack.c.bf16 %v542, %v538
    %v568 = vpack.c.bf16 %v550, %v546
    %v569 = vpack.c.bf16 %v552, %v548
    %570 = vmatprep.subr.bf16.mxu0 %v249
    %571 = vmatpush1.bf16.msra.mxu0 %v248
    %572 = vmatprep.subr.bf16.mxu0 %v251
    %573 = vmatpush1.bf16.msra.mxu0 %v250
    %574 = vmatprep.subr.bf16.mxu0 %v253
    %575 = vmatpush1.bf16.msra.mxu0 %v252
    %576 = vmatprep.subr.bf16.mxu0 %v255
    %577 = vmatpush1.bf16.msra.mxu0 %v254
    %578 = vmatprep.subr.bf16.mxu0 %v257
    %579 = vmatpush1.bf16.msra.mxu0 %v256
    %580 = vmatprep.subr.bf16.mxu0 %v259
    %581 = vmatpush1.bf16.msra.mxu0 %v258
    %582 = vmatprep.subr.bf16.mxu0 %v261
    %583 = vmatpush1.bf16.msra.mxu0 %v260
    %584 = vmatprep.subr.bf16.mxu0 %v263
    %585 = vmatpush1.bf16.msra.mxu0 %v262
    %586 = vmatprep.subr.bf16.mxu0 %v265
    %587 = vmatpush1.bf16.msra.mxu0 %v264
    %588 = vmatprep.subr.bf16.mxu0 %v267
    %589 = vmatpush1.bf16.msra.mxu0 %v266
    %590 = vmatprep.subr.bf16.mxu0 %v269
    %591 = vmatpush1.bf16.msra.mxu0 %v268
    %592 = vmatprep.subr.bf16.mxu0 %v271
    %593 = vmatpush1.bf16.msra.mxu0 %v270
    %594 = vmatprep.subr.bf16.mxu0 %v273
    %595 = vmatpush1.bf16.msra.mxu0 %v272
    %596 = vmatprep.subr.bf16.mxu0 %v275
    %597 = vmatpush1.bf16.msra.mxu0 %v274
    %598 = vmatprep.subr.bf16.mxu0 %v277
    %599 = vmatpush1.bf16.msra.mxu0 %v276
    %600 = vmatprep.subr.bf16.mxu0 %v279
    %601 = vmatpush1.bf16.msra.mxu0 %v278
    %602 = vmatprep.mubr.bf16.mxu0 %v555
    %603 = vmatmul.mubr.bf16.gmra.mrb[0].mxu0 %v554
    %v604 = vpop.f32.mrb[0].mxu0
    %v605 = vadd.f32 %v72, %v604
    %v606 = vpop.f32.mrb[0].mxu0
    %v607 = vadd.f32 %v73, %v606
    %v608 = vpop.f32.mrb[0].mxu0
    %v609 = vadd.f32 %v74, %v608
    %v610 = vpop.f32.mrb[0].mxu0
    %v611 = vadd.f32 %v75, %v610
    %612 = vmatprep.mubr.bf16.mxu0 %v557
    %613 = vmatmul.mubr.bf16.gmra.mrb[0].mxu0 %v556
    %v614 = vpop.f32.mrb[0].mxu0
    %v615 = vadd.f32 %v76, %v614
    %v616 = vpop.f32.mrb[0].mxu0
    %v617 = vadd.f32 %v77, %v616
    %v618 = vpop.f32.mrb[0].mxu0
    %v619 = vadd.f32 %v78, %v618
    %v620 = vpop.f32.mrb[0].mxu0
    %v621 = vadd.f32 %v79, %v620
    %622 = vmatprep.mubr.bf16.mxu0 %v559
    %623 = vmatmul.mubr.bf16.gmra.mrb[0].mxu0 %v558
    %v624 = vpop.f32.mrb[0].mxu0
    %v625 = vadd.f32 %v80, %v624
    %v626 = vpop.f32.mrb[0].mxu0
    %v627 = vadd.f32 %v81, %v626
    %v628 = vpop.f32.mrb[0].mxu0
    %v629 = vadd.f32 %v82, %v628
    %v630 = vpop.f32.mrb[0].mxu0
    %v631 = vadd.f32 %v83, %v630
    %632 = vmatprep.mubr.bf16.mxu0 %v561
    %633 = vmatmul.mubr.bf16.gmra.mrb[0].mxu0 %v560
    %v634 = vpop.f32.mrb[0].mxu0
    %v635 = vadd.f32 %v84, %v634
    %v636 = vpop.f32.mrb[0].mxu0
    %v637 = vadd.f32 %v85, %v636
    %v638 = vpop.f32.mrb[0].mxu0
    %v639 = vadd.f32 %v86, %v638
    %v640 = vpop.f32.mrb[0].mxu0
    %v641 = vadd.f32 %v87, %v640
    %642 = vmatprep.mubr.bf16.mxu0 %v563
    %643 = vmatmul.mubr.bf16.gmra.mrb[0].mxu0 %v562
    %v644 = vpop.f32.mrb[0].mxu0
    %v645 = vadd.f32 %v88, %v644
    %v646 = vpop.f32.mrb[0].mxu0
    %v647 = vadd.f32 %v89, %v646
    %v648 = vpop.f32.mrb[0].mxu0
    %v649 = vadd.f32 %v90, %v648
    %v650 = vpop.f32.mrb[0].mxu0
    %v651 = vadd.f32 %v91, %v650
    %652 = vmatprep.mubr.bf16.mxu0 %v565
    %653 = vmatmul.mubr.bf16.gmra.mrb[0].mxu0 %v564
    %v654 = vpop.f32.mrb[0].mxu0
    %v655 = vadd.f32 %v92, %v654
    %v656 = vpop.f32.mrb[0].mxu0
    %v657 = vadd.f32 %v93, %v656
    %v658 = vpop.f32.mrb[0].mxu0
    %v659 = vadd.f32 %v94, %v658
    %v660 = vpop.f32.mrb[0].mxu0
    %v661 = vadd.f32 %v95, %v660
    %662 = vmatprep.mubr.bf16.mxu0 %v567
    %663 = vmatmul.mubr.bf16.gmra.mrb[0].mxu0 %v566
    %v664 = vpop.f32.mrb[0].mxu0
    %v665 = vadd.f32 %v96, %v664
    %v666 = vpop.f32.mrb[0].mxu0
    %v667 = vadd.f32 %v97, %v666
    %v668 = vpop.f32.mrb[0].mxu0
    %v669 = vadd.f32 %v98, %v668
    %v670 = vpop.f32.mrb[0].mxu0
    %v671 = vadd.f32 %v99, %v670
    %672 = vmatprep.mubr.bf16.mxu0 %v569
    %673 = vmatmul.mubr.bf16.gmra.mrb[0].mxu0 %v568
    %v674 = vpop.f32.mrb[0].mxu0
    %v675 = vadd.f32 %v100, %v674
    %v676 = vpop.f32.mrb[0].mxu0
    %v677 = vadd.f32 %v101, %v676
    %v678 = vpop.f32.mrb[0].mxu0
    %v679 = vadd.f32 %v102, %v678
    %v680 = vpop.f32.mrb[0].mxu0
    %v681 = vadd.f32 %v103, %v680
    %682 = vdwg.mxu0
    %v683 = vpack.c.bf16 %v609, %v605
    %v684 = vpack.c.bf16 %v611, %v607
    %v685 = vpack.c.bf16 %v619, %v615
    %v686 = vpack.c.bf16 %v621, %v617
    %v687 = vpack.c.bf16 %v629, %v625
    %v688 = vpack.c.bf16 %v631, %v627
    %v689 = vpack.c.bf16 %v639, %v635
    %v690 = vpack.c.bf16 %v641, %v637
    %v691 = vpack.c.bf16 %v649, %v645
    %v692 = vpack.c.bf16 %v651, %v647
    %v693 = vpack.c.bf16 %v659, %v655
    %v694 = vpack.c.bf16 %v661, %v657
    %v695 = vpack.c.bf16 %v669, %v665
    %v696 = vpack.c.bf16 %v671, %v667
    %v697 = vpack.c.bf16 %v679, %v675
    %v698 = vpack.c.bf16 %v681, %v677
    %699 = vmatprep.subr.bf16.mxu0 %v249
    %700 = vmatpush1.bf16.msra.mxu0 %v248
    %701 = vmatprep.subr.bf16.mxu0 %v251
    %702 = vmatpush1.bf16.msra.mxu0 %v250
    %703 = vmatprep.subr.bf16.mxu0 %v253
    %704 = vmatpush1.bf16.msra.mxu0 %v252
    %705 = vmatprep.subr.bf16.mxu0 %v255
    %706 = vmatpush1.bf16.msra.mxu0 %v254
    %707 = vmatprep.subr.bf16.mxu0 %v257
    %708 = vmatpush1.bf16.msra.mxu0 %v256
    %709 = vmatprep.subr.bf16.mxu0 %v259
    %710 = vmatpush1.bf16.msra.mxu0 %v258
    %711 = vmatprep.subr.bf16.mxu0 %v261
    %712 = vmatpush1.bf16.msra.mxu0 %v260
    %713 = vmatprep.subr.bf16.mxu0 %v263
    %714 = vmatpush1.bf16.msra.mxu0 %v262
    %715 = vmatprep.subr.bf16.mxu0 %v265
    %716 = vmatpush1.bf16.msra.mxu0 %v264
    %717 = vmatprep.subr.bf16.mxu0 %v267
    %718 = vmatpush1.bf16.msra.mxu0 %v266
    %719 = vmatprep.subr.bf16.mxu0 %v269
    %720 = vmatpush1.bf16.msra.mxu0 %v268
    %721 = vmatprep.subr.bf16.mxu0 %v271
    %722 = vmatpush1.bf16.msra.mxu0 %v270
    %723 = vmatprep.subr.bf16.mxu0 %v273
    %724 = vmatpush1.bf16.msra.mxu0 %v272
    %725 = vmatprep.subr.bf16.mxu0 %v275
    %726 = vmatpush1.bf16.msra.mxu0 %v274
    %727 = vmatprep.subr.bf16.mxu0 %v277
    %728 = vmatpush1.bf16.msra.mxu0 %v276
    %729 = vmatprep.subr.bf16.mxu0 %v279
    %730 = vmatpush1.bf16.msra.mxu0 %v278
    %731 = vmatprep.mubr.bf16.mxu0 %v684
    %732 = vmatmul.mubr.bf16.gmra.mrb[0].mxu0 %v683
    %v733 = vpop.f32.mrb[0].mxu0
    %v734 = vadd.f32 %v72, %v733
    %v735 = vpop.f32.mrb[0].mxu0
    %v736 = vadd.f32 %v73, %v735
    %v737 = vpop.f32.mrb[0].mxu0
    %v738 = vadd.f32 %v74, %v737
    %v739 = vpop.f32.mrb[0].mxu0
    %v740 = vadd.f32 %v75, %v739
    %741 = vmatprep.mubr.bf16.mxu0 %v686
    %742 = vmatmul.mubr.bf16.gmra.mrb[0].mxu0 %v685
    %v743 = vpop.f32.mrb[0].mxu0
    %v744 = vadd.f32 %v76, %v743
    %v745 = vpop.f32.mrb[0].mxu0
    %v746 = vadd.f32 %v77, %v745
    %v747 = vpop.f32.mrb[0].mxu0
    %v748 = vadd.f32 %v78, %v747
    %v749 = vpop.f32.mrb[0].mxu0
    %v750 = vadd.f32 %v79, %v749
    %751 = vmatprep.mubr.bf16.mxu0 %v688
    %752 = vmatmul.mubr.bf16.gmra.mrb[0].mxu0 %v687
    %v753 = vpop.f32.mrb[0].mxu0
    %v754 = vadd.f32 %v80, %v753
    %v755 = vpop.f32.mrb[0].mxu0
    %v756 = vadd.f32 %v81, %v755
    %v757 = vpop.f32.mrb[0].mxu0
    %v758 = vadd.f32 %v82, %v757
    %v759 = vpop.f32.mrb[0].mxu0
    %v760 = vadd.f32 %v83, %v759
    %761 = vmatprep.mubr.bf16.mxu0 %v690
    %762 = vmatmul.mubr.bf16.gmra.mrb[0].mxu0 %v689
    %v763 = vpop.f32.mrb[0].mxu0
    %v764 = vadd.f32 %v84, %v763
    %v765 = vpop.f32.mrb[0].mxu0
    %v766 = vadd.f32 %v85, %v765
    %v767 = vpop.f32.mrb[0].mxu0
    %v768 = vadd.f32 %v86, %v767
    %v769 = vpop.f32.mrb[0].mxu0
    %v770 = vadd.f32 %v87, %v769
    %771 = vmatprep.mubr.bf16.mxu0 %v692
    %772 = vmatmul.mubr.bf16.gmra.mrb[0].mxu0 %v691
    %v773 = vpop.f32.mrb[0].mxu0
    %v774 = vadd.f32 %v88, %v773
    %v775 = vpop.f32.mrb[0].mxu0
    %v776 = vadd.f32 %v89, %v775
    %v777 = vpop.f32.mrb[0].mxu0
    %v778 = vadd.f32 %v90, %v777
    %v779 = vpop.f32.mrb[0].mxu0
    %v780 = vadd.f32 %v91, %v779
    %781 = vmatprep.mubr.bf16.mxu0 %v694
    %782 = vmatmul.mubr.bf16.gmra.mrb[0].mxu0 %v693
    %v783 = vpop.f32.mrb[0].mxu0
    %v784 = vadd.f32 %v92, %v783
    %v785 = vpop.f32.mrb[0].mxu0
    %v786 = vadd.f32 %v93, %v785
    %v787 = vpop.f32.mrb[0].mxu0
    %v788 = vadd.f32 %v94, %v787
    %v789 = vpop.f32.mrb[0].mxu0
    %v790 = vadd.f32 %v95, %v789
    %791 = vmatprep.mubr.bf16.mxu0 %v696
    %792 = vmatmul.mubr.bf16.gmra.mrb[0].mxu0 %v695
    %v793 = vpop.f32.mrb[0].mxu0
    %v794 = vadd.f32 %v96, %v793
    %v795 = vpop.f32.mrb[0].mxu0
    %v796 = vadd.f32 %v97, %v795
    %v797 = vpop.f32.mrb[0].mxu0
    %v798 = vadd.f32 %v98, %v797
    %v799 = vpop.f32.mrb[0].mxu0
    %v800 = vadd.f32 %v99, %v799
    %801 = vmatprep.mubr.bf16.mxu0 %v698
    %802 = vmatmul.mubr.bf16.gmra.mrb[0].mxu0 %v697
    %v803 = vpop.f32.mrb[0].mxu0
    %v804 = vadd.f32 %v100, %v803
    %v805 = vpop.f32.mrb[0].mxu0
    %v806 = vadd.f32 %v101, %v805
    %v807 = vpop.f32.mrb[0].mxu0
    %v808 = vadd.f32 %v102, %v807
    %v809 = vpop.f32.mrb[0].mxu0
    %v810 = vadd.f32 %v103, %v809
    %811 = vdwg.mxu0
    %v812 = vpack.c.bf16 %v738, %v734
    %v813 = vpack.c.bf16 %v740, %v736
    %v814 = vpack.c.bf16 %v748, %v744
    %v815 = vpack.c.bf16 %v750, %v746
    %v816 = vpack.c.bf16 %v758, %v754
    %v817 = vpack.c.bf16 %v760, %v756
    %v818 = vpack.c.bf16 %v768, %v764
    %v819 = vpack.c.bf16 %v770, %v766
    %v820 = vpack.c.bf16 %v778, %v774
    %v821 = vpack.c.bf16 %v780, %v776
    %v822 = vpack.c.bf16 %v788, %v784
    %v823 = vpack.c.bf16 %v790, %v786
    %v824 = vpack.c.bf16 %v798, %v794
    %v825 = vpack.c.bf16 %v800, %v796
    %v826 = vpack.c.bf16 %v808, %v804
    %v827 = vpack.c.bf16 %v810, %v806
    %828 = vmatprep.subr.bf16.mxu0 %v249
    %829 = vmatpush1.bf16.msra.mxu0 %v248
    %830 = vmatprep.subr.bf16.mxu0 %v251
    %831 = vmatpush1.bf16.msra.mxu0 %v250
    %832 = vmatprep.subr.bf16.mxu0 %v253
    %833 = vmatpush1.bf16.msra.mxu0 %v252
    %834 = vmatprep.subr.bf16.mxu0 %v255
    %835 = vmatpush1.bf16.msra.mxu0 %v254
    %836 = vmatprep.subr.bf16.mxu0 %v257
    %837 = vmatpush1.bf16.msra.mxu0 %v256
    %838 = vmatprep.subr.bf16.mxu0 %v259
    %839 = vmatpush1.bf16.msra.mxu0 %v258
    %840 = vmatprep.subr.bf16.mxu0 %v261
    %841 = vmatpush1.bf16.msra.mxu0 %v260
    %842 = vmatprep.subr.bf16.mxu0 %v263
    %843 = vmatpush1.bf16.msra.mxu0 %v262
    %844 = vmatprep.subr.bf16.mxu0 %v265
    %845 = vmatpush1.bf16.msra.mxu0 %v264
    %846 = vmatprep.subr.bf16.mxu0 %v267
    %847 = vmatpush1.bf16.msra.mxu0 %v266
    %848 = vmatprep.subr.bf16.mxu0 %v269
    %849 = vmatpush1.bf16.msra.mxu0 %v268
    %850 = vmatprep.subr.bf16.mxu0 %v271
    %851 = vmatpush1.bf16.msra.mxu0 %v270
    %852 = vmatprep.subr.bf16.mxu0 %v273
    %853 = vmatpush1.bf16.msra.mxu0 %v272
    %854 = vmatprep.subr.bf16.mxu0 %v275
    %855 = vmatpush1.bf16.msra.mxu0 %v274
    %856 = vmatprep.subr.bf16.mxu0 %v277
    %857 = vmatpush1.bf16.msra.mxu0 %v276
    %858 = vmatprep.subr.bf16.mxu0 %v279
    %859 = vmatpush1.bf16.msra.mxu0 %v278
    %860 = vmatprep.mubr.bf16.mxu0 %v813
    %861 = vmatmul.mubr.bf16.gmra.mrb[0].mxu0 %v812
    %v862 = vpop.f32.mrb[0].mxu0
    %v863 = vadd.f32 %v72, %v862
    %v864 = vpop.f32.mrb[0].mxu0
    %v865 = vadd.f32 %v73, %v864
    %v866 = vpop.f32.mrb[0].mxu0
    %v867 = vadd.f32 %v74, %v866
    %v868 = vpop.f32.mrb[0].mxu0
    %v869 = vadd.f32 %v75, %v868
    %870 = vmatprep.mubr.bf16.mxu0 %v815
    %871 = vmatmul.mubr.bf16.gmra.mrb[0].mxu0 %v814
    %v872 = vpop.f32.mrb[0].mxu0
    %v873 = vadd.f32 %v76, %v872
    %v874 = vpop.f32.mrb[0].mxu0
    %v875 = vadd.f32 %v77, %v874
    %v876 = vpop.f32.mrb[0].mxu0
    %v877 = vadd.f32 %v78, %v876
    %v878 = vpop.f32.mrb[0].mxu0
    %v879 = vadd.f32 %v79, %v878
    %880 = vmatprep.mubr.bf16.mxu0 %v817
    %881 = vmatmul.mubr.bf16.gmra.mrb[0].mxu0 %v816
    %v882 = vpop.f32.mrb[0].mxu0
    %v883 = vadd.f32 %v80, %v882
    %v884 = vpop.f32.mrb[0].mxu0
    %v885 = vadd.f32 %v81, %v884
    %v886 = vpop.f32.mrb[0].mxu0
    %v887 = vadd.f32 %v82, %v886
    %v888 = vpop.f32.mrb[0].mxu0
    %v889 = vadd.f32 %v83, %v888
    %890 = vmatprep.mubr.bf16.mxu0 %v819
    %891 = vmatmul.mubr.bf16.gmra.mrb[0].mxu0 %v818
    %v892 = vpop.f32.mrb[0].mxu0
    %v893 = vadd.f32 %v84, %v892
    %v894 = vpop.f32.mrb[0].mxu0
    %v895 = vadd.f32 %v85, %v894
    %v896 = vpop.f32.mrb[0].mxu0
    %v897 = vadd.f32 %v86, %v896
    %v898 = vpop.f32.mrb[0].mxu0
    %v899 = vadd.f32 %v87, %v898
    %900 = vmatprep.mubr.bf16.mxu0 %v821
    %901 = vmatmul.mubr.bf16.gmra.mrb[0].mxu0 %v820
    %v902 = vpop.f32.mrb[0].mxu0
    %v903 = vadd.f32 %v88, %v902
    %v904 = vpop.f32.mrb[0].mxu0
    %v905 = vadd.f32 %v89, %v904
    %v906 = vpop.f32.mrb[0].mxu0
    %v907 = vadd.f32 %v90, %v906
    %v908 = vpop.f32.mrb[0].mxu0
    %v909 = vadd.f32 %v91, %v908
    %910 = vmatprep.mubr.bf16.mxu0 %v823
    %911 = vmatmul.mubr.bf16.gmra.mrb[0].mxu0 %v822
    %v912 = vpop.f32.mrb[0].mxu0
    %v913 = vadd.f32 %v92, %v912
    %v914 = vpop.f32.mrb[0].mxu0
    %v915 = vadd.f32 %v93, %v914
    %v916 = vpop.f32.mrb[0].mxu0
    %v917 = vadd.f32 %v94, %v916
    %v918 = vpop.f32.mrb[0].mxu0
    %v919 = vadd.f32 %v95, %v918
    %920 = vmatprep.mubr.bf16.mxu0 %v825
    %921 = vmatmul.mubr.bf16.gmra.mrb[0].mxu0 %v824
    %v922 = vpop.f32.mrb[0].mxu0
    %v923 = vadd.f32 %v96, %v922
    %v924 = vpop.f32.mrb[0].mxu0
    %v925 = vadd.f32 %v97, %v924
    %v926 = vpop.f32.mrb[0].mxu0
    %v927 = vadd.f32 %v98, %v926
    %v928 = vpop.f32.mrb[0].mxu0
    %v929 = vadd.f32 %v99, %v928
    %930 = vmatprep.mubr.bf16.mxu0 %v827
    %931 = vmatmul.mubr.bf16.gmra.mrb[0].mxu0 %v826
    %v932 = vpop.f32.mrb[0].mxu0
    %v933 = vadd.f32 %v100, %v932
    %v934 = vpop.f32.mrb[0].mxu0
    %v935 = vadd.f32 %v101, %v934
    %v936 = vpop.f32.mrb[0].mxu0
    %v937 = vadd.f32 %v102, %v936
    %v938 = vpop.f32.mrb[0].mxu0
    %v939 = vadd.f32 %v103, %v938
    %940 = vdwg.mxu0
    %v941 = vpack.c.bf16 %v867, %v863
    %v942 = vpack.c.bf16 %v869, %v865
    %v943 = vpack.c.bf16 %v877, %v873
    %v944 = vpack.c.bf16 %v879, %v875
    %v945 = vpack.c.bf16 %v887, %v883
    %v946 = vpack.c.bf16 %v889, %v885
    %v947 = vpack.c.bf16 %v897, %v893
    %v948 = vpack.c.bf16 %v899, %v895
    %v949 = vpack.c.bf16 %v907, %v903
    %v950 = vpack.c.bf16 %v909, %v905
    %v951 = vpack.c.bf16 %v917, %v913
    %v952 = vpack.c.bf16 %v919, %v915
    %v953 = vpack.c.bf16 %v927, %v923
    %v954 = vpack.c.bf16 %v929, %v925
    %v955 = vpack.c.bf16 %v937, %v933
    %v956 = vpack.c.bf16 %v939, %v935
    %957 = vmatprep.subr.bf16.mxu0 %v249
    %958 = vmatpush1.bf16.msra.mxu0 %v248
    %959 = vmatprep.subr.bf16.mxu0 %v251
    %960 = vmatpush1.bf16.msra.mxu0 %v250
    %961 = vmatprep.subr.bf16.mxu0 %v253
    %962 = vmatpush1.bf16.msra.mxu0 %v252
    %963 = vmatprep.subr.bf16.mxu0 %v255
    %964 = vmatpush1.bf16.msra.mxu0 %v254
    %965 = vmatprep.subr.bf16.mxu0 %v257
    %966 = vmatpush1.bf16.msra.mxu0 %v256
    %967 = vmatprep.subr.bf16.mxu0 %v259
    %968 = vmatpush1.bf16.msra.mxu0 %v258
    %969 = vmatprep.subr.bf16.mxu0 %v261
    %970 = vmatpush1.bf16.msra.mxu0 %v260
    %971 = vmatprep.subr.bf16.mxu0 %v263
    %972 = vmatpush1.bf16.msra.mxu0 %v262
    %973 = vmatprep.subr.bf16.mxu0 %v265
    %974 = vmatpush1.bf16.msra.mxu0 %v264
    %975 = vmatprep.subr.bf16.mxu0 %v267
    %976 = vmatpush1.bf16.msra.mxu0 %v266
    %977 = vmatprep.subr.bf16.mxu0 %v269
    %978 = vmatpush1.bf16.msra.mxu0 %v268
    %979 = vmatprep.subr.bf16.mxu0 %v271
    %980 = vmatpush1.bf16.msra.mxu0 %v270
    %981 = vmatprep.subr.bf16.mxu0 %v273
    %982 = vmatpush1.bf16.msra.mxu0 %v272
    %983 = vmatprep.subr.bf16.mxu0 %v275
    %984 = vmatpush1.bf16.msra.mxu0 %v274
    %985 = vmatprep.subr.bf16.mxu0 %v277
    %986 = vmatpush1.bf16.msra.mxu0 %v276
    %987 = vmatprep.subr.bf16.mxu0 %v279
    %988 = vmatpush1.bf16.msra.mxu0 %v278
    %989 = vmatprep.mubr.bf16.mxu0 %v942
    %990 = vmatmul.mubr.bf16.gmra.mrb[0].mxu0 %v941
    %v991 = vpop.f32.mrb[0].mxu0
    %v992 = vadd.f32 %v72, %v991
    %v993 = vpop.f32.mrb[0].mxu0
    %v994 = vadd.f32 %v73, %v993
    %v995 = vpop.f32.mrb[0].mxu0
    %v996 = vadd.f32 %v74, %v995
    %v997 = vpop.f32.mrb[0].mxu0
    %v998 = vadd.f32 %v75, %v997
    %999 = vmatprep.mubr.bf16.mxu0 %v944
    %1000 = vmatmul.mubr.bf16.gmra.mrb[0].mxu0 %v943
    %v1001 = vpop.f32.mrb[0].mxu0
    %v1002 = vadd.f32 %v76, %v1001
    %v1003 = vpop.f32.mrb[0].mxu0
    %v1004 = vadd.f32 %v77, %v1003
    %v1005 = vpop.f32.mrb[0].mxu0
    %v1006 = vadd.f32 %v78, %v1005
    %v1007 = vpop.f32.mrb[0].mxu0
    %v1008 = vadd.f32 %v79, %v1007
    %1009 = vmatprep.mubr.bf16.mxu0 %v946
    %1010 = vmatmul.mubr.bf16.gmra.mrb[0].mxu0 %v945
    %v1011 = vpop.f32.mrb[0].mxu0
    %v1012 = vadd.f32 %v80, %v1011
    %v1013 = vpop.f32.mrb[0].mxu0
    %v1014 = vadd.f32 %v81, %v1013
    %v1015 = vpop.f32.mrb[0].mxu0
    %v1016 = vadd.f32 %v82, %v1015
    %v1017 = vpop.f32.mrb[0].mxu0
    %v1018 = vadd.f32 %v83, %v1017
    %1019 = vmatprep.mubr.bf16.mxu0 %v948
    %1020 = vmatmul.mubr.bf16.gmra.mrb[0].mxu0 %v947
    %v1021 = vpop.f32.mrb[0].mxu0
    %v1022 = vadd.f32 %v84, %v1021
    %v1023 = vpop.f32.mrb[0].mxu0
    %v1024 = vadd.f32 %v85, %v1023
    %v1025 = vpop.f32.mrb[0].mxu0
    %v1026 = vadd.f32 %v86, %v1025
    %v1027 = vpop.f32.mrb[0].mxu0
    %v1028 = vadd.f32 %v87, %v1027
    %1029 = vmatprep.mubr.bf16.mxu0 %v950
    %1030 = vmatmul.mubr.bf16.gmra.mrb[0].mxu0 %v949
    %v1031 = vpop.f32.mrb[0].mxu0
    %v1032 = vadd.f32 %v88, %v1031
    %v1033 = vpop.f32.mrb[0].mxu0
    %v1034 = vadd.f32 %v89, %v1033
    %v1035 = vpop.f32.mrb[0].mxu0
    %v1036 = vadd.f32 %v90, %v1035
    %v1037 = vpop.f32.mrb[0].mxu0
    %v1038 = vadd.f32 %v91, %v1037
    %1039 = vmatprep.mubr.bf16.mxu0 %v952
    %1040 = vmatmul.mubr.bf16.gmra.mrb[0].mxu0 %v951
    %v1041 = vpop.f32.mrb[0].mxu0
    %v1042 = vadd.f32 %v92, %v1041
    %v1043 = vpop.f32.mrb[0].mxu0
    %v1044 = vadd.f32 %v93, %v1043
    %v1045 = vpop.f32.mrb[0].mxu0
    %v1046 = vadd.f32 %v94, %v1045
    %v1047 = vpop.f32.mrb[0].mxu0
    %v1048 = vadd.f32 %v95, %v1047
    %1049 = vmatprep.mubr.bf16.mxu0 %v954
    %1050 = vmatmul.mubr.bf16.gmra.mrb[0].mxu0 %v953
    %v1051 = vpop.f32.mrb[0].mxu0
    %v1052 = vadd.f32 %v96, %v1051
    %v1053 = vpop.f32.mrb[0].mxu0
    %v1054 = vadd.f32 %v97, %v1053
    %v1055 = vpop.f32.mrb[0].mxu0
    %v1056 = vadd.f32 %v98, %v1055
    %v1057 = vpop.f32.mrb[0].mxu0
    %v1058 = vadd.f32 %v99, %v1057
    %1059 = vmatprep.mubr.bf16.mxu0 %v956
    %1060 = vmatmul.mubr.bf16.gmra.mrb[0].mxu0 %v955
    %v1061 = vpop.f32.mrb[0].mxu0
    %v1062 = vadd.f32 %v100, %v1061
    %v1063 = vpop.f32.mrb[0].mxu0
    %v1064 = vadd.f32 %v101, %v1063
    %v1065 = vpop.f32.mrb[0].mxu0
    %v1066 = vadd.f32 %v102, %v1065
    %v1067 = vpop.f32.mrb[0].mxu0
    %v1068 = vadd.f32 %v103, %v1067
    %1069 = vdwg.mxu0
    %v1070 = vpack.c.bf16 %v996, %v992
    %v1071 = vpack.c.bf16 %v998, %v994
    %v1072 = vpack.c.bf16 %v1006, %v1002
    %v1073 = vpack.c.bf16 %v1008, %v1004
    %v1074 = vpack.c.bf16 %v1016, %v1012
    %v1075 = vpack.c.bf16 %v1018, %v1014
    %v1076 = vpack.c.bf16 %v1026, %v1022
    %v1077 = vpack.c.bf16 %v1028, %v1024
    %v1078 = vpack.c.bf16 %v1036, %v1032
    %v1079 = vpack.c.bf16 %v1038, %v1034
    %v1080 = vpack.c.bf16 %v1046, %v1042
    %v1081 = vpack.c.bf16 %v1048, %v1044
    %v1082 = vpack.c.bf16 %v1056, %v1052
    %v1083 = vpack.c.bf16 %v1058, %v1054
    %v1084 = vpack.c.bf16 %v1066, %v1062
    %v1085 = vpack.c.bf16 %v1068, %v1064
    %1086 = vmatprep.subr.bf16.mxu0 %v249
    %1087 = vmatpush1.bf16.msra.mxu0 %v248
    %1088 = vmatprep.subr.bf16.mxu0 %v251
    %1089 = vmatpush1.bf16.msra.mxu0 %v250
    %1090 = vmatprep.subr.bf16.mxu0 %v253
    %1091 = vmatpush1.bf16.msra.mxu0 %v252
    %1092 = vmatprep.subr.bf16.mxu0 %v255
    %1093 = vmatpush1.bf16.msra.mxu0 %v254
    %1094 = vmatprep.subr.bf16.mxu0 %v257
    %1095 = vmatpush1.bf16.msra.mxu0 %v256
    %1096 = vmatprep.subr.bf16.mxu0 %v259
    %1097 = vmatpush1.bf16.msra.mxu0 %v258
    %1098 = vmatprep.subr.bf16.mxu0 %v261
    %1099 = vmatpush1.bf16.msra.mxu0 %v260
    %1100 = vmatprep.subr.bf16.mxu0 %v263
    %1101 = vmatpush1.bf16.msra.mxu0 %v262
    %1102 = vmatprep.subr.bf16.mxu0 %v265
    %1103 = vmatpush1.bf16.msra.mxu0 %v264
    %1104 = vmatprep.subr.bf16.mxu0 %v267
    %1105 = vmatpush1.bf16.msra.mxu0 %v266
    %1106 = vmatprep.subr.bf16.mxu0 %v269
    %1107 = vmatpush1.bf16.msra.mxu0 %v268
    %1108 = vmatprep.subr.bf16.mxu0 %v271
    %1109 = vmatpush1.bf16.msra.mxu0 %v270
    %1110 = vmatprep.subr.bf16.mxu0 %v273
    %1111 = vmatpush1.bf16.msra.mxu0 %v272
    %1112 = vmatprep.subr.bf16.mxu0 %v275
    %1113 = vmatpush1.bf16.msra.mxu0 %v274
    %1114 = vmatprep.subr.bf16.mxu0 %v277
    %1115 = vmatpush1.bf16.msra.mxu0 %v276
    %1116 = vmatprep.subr.bf16.mxu0 %v279
    %1117 = vmatpush1.bf16.msra.mxu0 %v278
    %1118 = vmatprep.mubr.bf16.mxu0 %v1071
    %1119 = vmatmul.mubr.bf16.gmra.mrb[0].mxu0 %v1070
    %v1120 = vpop.f32.mrb[0].mxu0
    %v1121 = vadd.f32 %v72, %v1120
    %v1122 = vpop.f32.mrb[0].mxu0
    %v1123 = vadd.f32 %v73, %v1122
    %v1124 = vpop.f32.mrb[0].mxu0
    %v1125 = vadd.f32 %v74, %v1124
    %v1126 = vpop.f32.mrb[0].mxu0
    %v1127 = vadd.f32 %v75, %v1126
    %1128 = vmatprep.mubr.bf16.mxu0 %v1073
    %1129 = vmatmul.mubr.bf16.gmra.mrb[0].mxu0 %v1072
    %v1130 = vpop.f32.mrb[0].mxu0
    %v1131 = vadd.f32 %v76, %v1130
    %v1132 = vpop.f32.mrb[0].mxu0
    %v1133 = vadd.f32 %v77, %v1132
    %v1134 = vpop.f32.mrb[0].mxu0
    %v1135 = vadd.f32 %v78, %v1134
    %v1136 = vpop.f32.mrb[0].mxu0
    %v1137 = vadd.f32 %v79, %v1136
    %1138 = vmatprep.mubr.bf16.mxu0 %v1075
    %1139 = vmatmul.mubr.bf16.gmra.mrb[0].mxu0 %v1074
    %v1140 = vpop.f32.mrb[0].mxu0
    %v1141 = vadd.f32 %v80, %v1140
    %v1142 = vpop.f32.mrb[0].mxu0
    %v1143 = vadd.f32 %v81, %v1142
    %v1144 = vpop.f32.mrb[0].mxu0
    %v1145 = vadd.f32 %v82, %v1144
    %v1146 = vpop.f32.mrb[0].mxu0
    %v1147 = vadd.f32 %v83, %v1146
    %1148 = vmatprep.mubr.bf16.mxu0 %v1077
    %1149 = vmatmul.mubr.bf16.gmra.mrb[0].mxu0 %v1076
    %v1150 = vpop.f32.mrb[0].mxu0
    %v1151 = vadd.f32 %v84, %v1150
    %v1152 = vpop.f32.mrb[0].mxu0
    %v1153 = vadd.f32 %v85, %v1152
    %v1154 = vpop.f32.mrb[0].mxu0
    %v1155 = vadd.f32 %v86, %v1154
    %v1156 = vpop.f32.mrb[0].mxu0
    %v1157 = vadd.f32 %v87, %v1156
    %1158 = vmatprep.mubr.bf16.mxu0 %v1079
    %1159 = vmatmul.mubr.bf16.gmra.mrb[0].mxu0 %v1078
    %v1160 = vpop.f32.mrb[0].mxu0
    %v1161 = vadd.f32 %v88, %v1160
    %v1162 = vpop.f32.mrb[0].mxu0
    %v1163 = vadd.f32 %v89, %v1162
    %v1164 = vpop.f32.mrb[0].mxu0
    %v1165 = vadd.f32 %v90, %v1164
    %v1166 = vpop.f32.mrb[0].mxu0
    %v1167 = vadd.f32 %v91, %v1166
    %1168 = vmatprep.mubr.bf16.mxu0 %v1081
    %1169 = vmatmul.mubr.bf16.gmra.mrb[0].mxu0 %v1080
    %v1170 = vpop.f32.mrb[0].mxu0
    %v1171 = vadd.f32 %v92, %v1170
    %v1172 = vpop.f32.mrb[0].mxu0
    %v1173 = vadd.f32 %v93, %v1172
    %v1174 = vpop.f32.mrb[0].mxu0
    %v1175 = vadd.f32 %v94, %v1174
    %v1176 = vpop.f32.mrb[0].mxu0
    %v1177 = vadd.f32 %v95, %v1176
    %1178 = vmatprep.mubr.bf16.mxu0 %v1083
    %1179 = vmatmul.mubr.bf16.gmra.mrb[0].mxu0 %v1082
    %v1180 = vpop.f32.mrb[0].mxu0
    %v1181 = vadd.f32 %v96, %v1180
    %v1182 = vpop.f32.mrb[0].mxu0
    %v1183 = vadd.f32 %v97, %v1182
    %v1184 = vpop.f32.mrb[0].mxu0
    %v1185 = vadd.f32 %v98, %v1184
    %v1186 = vpop.f32.mrb[0].mxu0
    %v1187 = vadd.f32 %v99, %v1186
    %1188 = vmatprep.mubr.bf16.mxu0 %v1085
    %1189 = vmatmul.mubr.bf16.gmra.mrb[0].mxu0 %v1084
    %v1190 = vpop.f32.mrb[0].mxu0
    %v1191 = vadd.f32 %v100, %v1190
    %v1192 = vpop.f32.mrb[0].mxu0
    %v1193 = vadd.f32 %v101, %v1192
    %v1194 = vpop.f32.mrb[0].mxu0
    %v1195 = vadd.f32 %v102, %v1194
    %v1196 = vpop.f32.mrb[0].mxu0
    %v1197 = vadd.f32 %v103, %v1196
    %1198 = vdwg.mxu0
    %v1199 = vpack.c.bf16 %v1125, %v1121
    %v1200 = vpack.c.bf16 %v1127, %v1123
    %v1201 = vpack.c.bf16 %v1135, %v1131
    %v1202 = vpack.c.bf16 %v1137, %v1133
    %v1203 = vpack.c.bf16 %v1145, %v1141
    %v1204 = vpack.c.bf16 %v1147, %v1143
    %v1205 = vpack.c.bf16 %v1155, %v1151
    %v1206 = vpack.c.bf16 %v1157, %v1153
    %v1207 = vpack.c.bf16 %v1165, %v1161
    %v1208 = vpack.c.bf16 %v1167, %v1163
    %v1209 = vpack.c.bf16 %v1175, %v1171
    %v1210 = vpack.c.bf16 %v1177, %v1173
    %v1211 = vpack.c.bf16 %v1185, %v1181
    %v1212 = vpack.c.bf16 %v1187, %v1183
    %v1213 = vpack.c.bf16 %v1195, %v1191
    %v1214 = vpack.c.bf16 %v1197, %v1193
    %1215 = vmatprep.subr.bf16.mxu0 %v249
    %1216 = vmatpush1.bf16.msra.mxu0 %v248
    %1217 = vmatprep.subr.bf16.mxu0 %v251
    %1218 = vmatpush1.bf16.msra.mxu0 %v250
    %1219 = vmatprep.subr.bf16.mxu0 %v253
    %1220 = vmatpush1.bf16.msra.mxu0 %v252
    %1221 = vmatprep.subr.bf16.mxu0 %v255
    %1222 = vmatpush1.bf16.msra.mxu0 %v254
    %1223 = vmatprep.subr.bf16.mxu0 %v257
    %1224 = vmatpush1.bf16.msra.mxu0 %v256
    %1225 = vmatprep.subr.bf16.mxu0 %v259
    %1226 = vmatpush1.bf16.msra.mxu0 %v258
    %1227 = vmatprep.subr.bf16.mxu0 %v261
    %1228 = vmatpush1.bf16.msra.mxu0 %v260
    %1229 = vmatprep.subr.bf16.mxu0 %v263
    %1230 = vmatpush1.bf16.msra.mxu0 %v262
    %1231 = vmatprep.subr.bf16.mxu0 %v265
    %1232 = vmatpush1.bf16.msra.mxu0 %v264
    %1233 = vmatprep.subr.bf16.mxu0 %v267
    %1234 = vmatpush1.bf16.msra.mxu0 %v266
    %1235 = vmatprep.subr.bf16.mxu0 %v269
    %1236 = vmatpush1.bf16.msra.mxu0 %v268
    %1237 = vmatprep.subr.bf16.mxu0 %v271
    %1238 = vmatpush1.bf16.msra.mxu0 %v270
    %1239 = vmatprep.subr.bf16.mxu0 %v273
    %1240 = vmatpush1.bf16.msra.mxu0 %v272
    %1241 = vmatprep.subr.bf16.mxu0 %v275
    %1242 = vmatpush1.bf16.msra.mxu0 %v274
    %1243 = vmatprep.subr.bf16.mxu0 %v277
    %1244 = vmatpush1.bf16.msra.mxu0 %v276
    %1245 = vmatprep.subr.bf16.mxu0 %v279
    %1246 = vmatpush1.bf16.msra.mxu0 %v278
    %1247 = vmatprep.mubr.bf16.mxu0 %v1200
    %1248 = vmatmul.mubr.bf16.gmra.mrb[0].mxu0 %v1199
    %v1249 = vpop.f32.mrb[0].mxu0
    %v1250 = vadd.f32 %v72, %v1249
    %v1251 = vpop.f32.mrb[0].mxu0
    %v1252 = vadd.f32 %v73, %v1251
    %v1253 = vpop.f32.mrb[0].mxu0
    %v1254 = vadd.f32 %v74, %v1253
    %v1255 = vpop.f32.mrb[0].mxu0
    %v1256 = vadd.f32 %v75, %v1255
    %1257 = vmatprep.mubr.bf16.mxu0 %v1202
    %1258 = vmatmul.mubr.bf16.gmra.mrb[0].mxu0 %v1201
    %v1259 = vpop.f32.mrb[0].mxu0
    %v1260 = vadd.f32 %v76, %v1259
    %v1261 = vpop.f32.mrb[0].mxu0
    %v1262 = vadd.f32 %v77, %v1261
    %v1263 = vpop.f32.mrb[0].mxu0
    %v1264 = vadd.f32 %v78, %v1263
    %v1265 = vpop.f32.mrb[0].mxu0
    %v1266 = vadd.f32 %v79, %v1265
    %1267 = vmatprep.mubr.bf16.mxu0 %v1204
    %1268 = vmatmul.mubr.bf16.gmra.mrb[0].mxu0 %v1203
    %v1269 = vpop.f32.mrb[0].mxu0
    %v1270 = vadd.f32 %v80, %v1269
    %v1271 = vpop.f32.mrb[0].mxu0
    %v1272 = vadd.f32 %v81, %v1271
    %v1273 = vpop.f32.mrb[0].mxu0
    %v1274 = vadd.f32 %v82, %v1273
    %v1275 = vpop.f32.mrb[0].mxu0
    %v1276 = vadd.f32 %v83, %v1275
    %1277 = vmatprep.mubr.bf16.mxu0 %v1206
    %1278 = vmatmul.mubr.bf16.gmra.mrb[0].mxu0 %v1205
    %v1279 = vpop.f32.mrb[0].mxu0
    %v1280 = vadd.f32 %v84, %v1279
    %v1281 = vpop.f32.mrb[0].mxu0
    %v1282 = vadd.f32 %v85, %v1281
    %v1283 = vpop.f32.mrb[0].mxu0
    %v1284 = vadd.f32 %v86, %v1283
    %v1285 = vpop.f32.mrb[0].mxu0
    %v1286 = vadd.f32 %v87, %v1285
    %1287 = vmatprep.mubr.bf16.mxu0 %v1208
    %1288 = vmatmul.mubr.bf16.gmra.mrb[0].mxu0 %v1207
    %v1289 = vpop.f32.mrb[0].mxu0
    %v1290 = vadd.f32 %v88, %v1289
    %v1291 = vpop.f32.mrb[0].mxu0
    %v1292 = vadd.f32 %v89, %v1291
    %v1293 = vpop.f32.mrb[0].mxu0
    %v1294 = vadd.f32 %v90, %v1293
    %v1295 = vpop.f32.mrb[0].mxu0
    %v1296 = vadd.f32 %v91, %v1295
    %1297 = vmatprep.mubr.bf16.mxu0 %v1210
    %1298 = vmatmul.mubr.bf16.gmra.mrb[0].mxu0 %v1209
    %v1299 = vpop.f32.mrb[0].mxu0
    %v1300 = vadd.f32 %v92, %v1299
    %v1301 = vpop.f32.mrb[0].mxu0
    %v1302 = vadd.f32 %v93, %v1301
    %v1303 = vpop.f32.mrb[0].mxu0
    %v1304 = vadd.f32 %v94, %v1303
    %v1305 = vpop.f32.mrb[0].mxu0
    %v1306 = vadd.f32 %v95, %v1305
    %1307 = vmatprep.mubr.bf16.mxu0 %v1212
    %1308 = vmatmul.mubr.bf16.gmra.mrb[0].mxu0 %v1211
    %v1309 = vpop.f32.mrb[0].mxu0
    %v1310 = vadd.f32 %v96, %v1309
    %v1311 = vpop.f32.mrb[0].mxu0
    %v1312 = vadd.f32 %v97, %v1311
    %v1313 = vpop.f32.mrb[0].mxu0
    %v1314 = vadd.f32 %v98, %v1313
    %v1315 = vpop.f32.mrb[0].mxu0
    %v1316 = vadd.f32 %v99, %v1315
    %1317 = vmatprep.mubr.bf16.mxu0 %v1214
    %1318 = vmatmul.mubr.bf16.gmra.mrb[0].mxu0 %v1213
    %v1319 = vpop.f32.mrb[0].mxu0
    %v1320 = vadd.f32 %v100, %v1319
    %v1321 = vpop.f32.mrb[0].mxu0
    %v1322 = vadd.f32 %v101, %v1321
    %v1323 = vpop.f32.mrb[0].mxu0
    %v1324 = vadd.f32 %v102, %v1323
    %v1325 = vpop.f32.mrb[0].mxu0
    %v1326 = vadd.f32 %v103, %v1325
    %1327 = vdwg.mxu0
    %v1328 = vpack.c.bf16 %v1254, %v1250
    %v1329 = vpack.c.bf16 %v1256, %v1252
    %v1330 = vpack.c.bf16 %v1264, %v1260
    %v1331 = vpack.c.bf16 %v1266, %v1262
    %v1332 = vpack.c.bf16 %v1274, %v1270
    %v1333 = vpack.c.bf16 %v1276, %v1272
    %v1334 = vpack.c.bf16 %v1284, %v1280
    %v1335 = vpack.c.bf16 %v1286, %v1282
    %v1336 = vpack.c.bf16 %v1294, %v1290
    %v1337 = vpack.c.bf16 %v1296, %v1292
    %v1338 = vpack.c.bf16 %v1304, %v1300
    %v1339 = vpack.c.bf16 %v1306, %v1302
    %v1340 = vpack.c.bf16 %v1314, %v1310
    %v1341 = vpack.c.bf16 %v1316, %v1312
    %v1342 = vpack.c.bf16 %v1324, %v1320
    %v1343 = vpack.c.bf16 %v1326, %v1322
    %1344 = vmatprep.subr.bf16.mxu0 %v249
    %1345 = vmatpush1.bf16.msra.mxu0 %v248
    %1346 = vmatprep.subr.bf16.mxu0 %v251
    %1347 = vmatpush1.bf16.msra.mxu0 %v250
    %1348 = vmatprep.subr.bf16.mxu0 %v253
    %1349 = vmatpush1.bf16.msra.mxu0 %v252
    %1350 = vmatprep.subr.bf16.mxu0 %v255
    %1351 = vmatpush1.bf16.msra.mxu0 %v254
    %1352 = vmatprep.subr.bf16.mxu0 %v257
    %1353 = vmatpush1.bf16.msra.mxu0 %v256
    %1354 = vmatprep.subr.bf16.mxu0 %v259
    %1355 = vmatpush1.bf16.msra.mxu0 %v258
    %1356 = vmatprep.subr.bf16.mxu0 %v261
    %1357 = vmatpush1.bf16.msra.mxu0 %v260
    %1358 = vmatprep.subr.bf16.mxu0 %v263
    %1359 = vmatpush1.bf16.msra.mxu0 %v262
    %1360 = vmatprep.subr.bf16.mxu0 %v265
    %1361 = vmatpush1.bf16.msra.mxu0 %v264
    %1362 = vmatprep.subr.bf16.mxu0 %v267
    %1363 = vmatpush1.bf16.msra.mxu0 %v266
    %1364 = vmatprep.subr.bf16.mxu0 %v269
    %1365 = vmatpush1.bf16.msra.mxu0 %v268
    %1366 = vmatprep.subr.bf16.mxu0 %v271
    %1367 = vmatpush1.bf16.msra.mxu0 %v270
    %1368 = vmatprep.subr.bf16.mxu0 %v273
    %1369 = vmatpush1.bf16.msra.mxu0 %v272
    %1370 = vmatprep.subr.bf16.mxu0 %v275
    %1371 = vmatpush1.bf16.msra.mxu0 %v274
    %1372 = vmatprep.subr.bf16.mxu0 %v277
    %1373 = vmatpush1.bf16.msra.mxu0 %v276
    %1374 = vmatprep.subr.bf16.mxu0 %v279
    %1375 = vmatpush1.bf16.msra.mxu0 %v278
    %1376 = vmatprep.mubr.bf16.mxu0 %v1329
    %1377 = vmatmul.mubr.bf16.gmra.mrb[0].mxu0 %v1328
    %v1378 = vpop.f32.mrb[0].mxu0
    %v1379 = vadd.f32 %v72, %v1378
    %v1380 = vpop.f32.mrb[0].mxu0
    %v1381 = vadd.f32 %v73, %v1380
    %v1382 = vpop.f32.mrb[0].mxu0
    %v1383 = vadd.f32 %v74, %v1382
    %v1384 = vpop.f32.mrb[0].mxu0
    %v1385 = vadd.f32 %v75, %v1384
    %1386 = vmatprep.mubr.bf16.mxu0 %v1331
    %1387 = vmatmul.mubr.bf16.gmra.mrb[0].mxu0 %v1330
    %v1388 = vpop.f32.mrb[0].mxu0
    %v1389 = vadd.f32 %v76, %v1388
    %v1390 = vpop.f32.mrb[0].mxu0
    %v1391 = vadd.f32 %v77, %v1390
    %v1392 = vpop.f32.mrb[0].mxu0
    %v1393 = vadd.f32 %v78, %v1392
    %v1394 = vpop.f32.mrb[0].mxu0
    %v1395 = vadd.f32 %v79, %v1394
    %1396 = vmatprep.mubr.bf16.mxu0 %v1333
    %1397 = vmatmul.mubr.bf16.gmra.mrb[0].mxu0 %v1332
    %v1398 = vpop.f32.mrb[0].mxu0
    %v1399 = vadd.f32 %v80, %v1398
    %v1400 = vpop.f32.mrb[0].mxu0
    %v1401 = vadd.f32 %v81, %v1400
    %v1402 = vpop.f32.mrb[0].mxu0
    %v1403 = vadd.f32 %v82, %v1402
    %v1404 = vpop.f32.mrb[0].mxu0
    %v1405 = vadd.f32 %v83, %v1404
    %1406 = vmatprep.mubr.bf16.mxu0 %v1335
    %1407 = vmatmul.mubr.bf16.gmra.mrb[0].mxu0 %v1334
    %v1408 = vpop.f32.mrb[0].mxu0
    %v1409 = vadd.f32 %v84, %v1408
    %v1410 = vpop.f32.mrb[0].mxu0
    %v1411 = vadd.f32 %v85, %v1410
    %v1412 = vpop.f32.mrb[0].mxu0
    %v1413 = vadd.f32 %v86, %v1412
    %v1414 = vpop.f32.mrb[0].mxu0
    %v1415 = vadd.f32 %v87, %v1414
    %1416 = vmatprep.mubr.bf16.mxu0 %v1337
    %1417 = vmatmul.mubr.bf16.gmra.mrb[0].mxu0 %v1336
    %v1418 = vpop.f32.mrb[0].mxu0
    %v1419 = vadd.f32 %v88, %v1418
    %v1420 = vpop.f32.mrb[0].mxu0
    %v1421 = vadd.f32 %v89, %v1420
    %v1422 = vpop.f32.mrb[0].mxu0
    %v1423 = vadd.f32 %v90, %v1422
    %v1424 = vpop.f32.mrb[0].mxu0
    %v1425 = vadd.f32 %v91, %v1424
    %1426 = vmatprep.mubr.bf16.mxu0 %v1339
    %1427 = vmatmul.mubr.bf16.gmra.mrb[0].mxu0 %v1338
    %v1428 = vpop.f32.mrb[0].mxu0
    %v1429 = vadd.f32 %v92, %v1428
    %v1430 = vpop.f32.mrb[0].mxu0
    %v1431 = vadd.f32 %v93, %v1430
    %v1432 = vpop.f32.mrb[0].mxu0
    %v1433 = vadd.f32 %v94, %v1432
    %v1434 = vpop.f32.mrb[0].mxu0
    %v1435 = vadd.f32 %v95, %v1434
    %1436 = vmatprep.mubr.bf16.mxu0 %v1341
    %1437 = vmatmul.mubr.bf16.gmra.mrb[0].mxu0 %v1340
    %v1438 = vpop.f32.mrb[0].mxu0
    %v1439 = vadd.f32 %v96, %v1438
    %v1440 = vpop.f32.mrb[0].mxu0
    %v1441 = vadd.f32 %v97, %v1440
    %v1442 = vpop.f32.mrb[0].mxu0
    %v1443 = vadd.f32 %v98, %v1442
    %v1444 = vpop.f32.mrb[0].mxu0
    %v1445 = vadd.f32 %v99, %v1444
    %1446 = vmatprep.mubr.bf16.mxu0 %v1343
    %1447 = vmatmul.mubr.bf16.gmra.mrb[0].mxu0 %v1342
    %v1448 = vpop.f32.mrb[0].mxu0
    %v1449 = vadd.f32 %v100, %v1448
    %v1450 = vpop.f32.mrb[0].mxu0
    %v1451 = vadd.f32 %v101, %v1450
    %v1452 = vpop.f32.mrb[0].mxu0
    %v1453 = vadd.f32 %v102, %v1452
    %v1454 = vpop.f32.mrb[0].mxu0
    %v1455 = vadd.f32 %v103, %v1454
    %1456 = vdwg.mxu0
    %v1457 = vpack.c.bf16 %v1383, %v1379
    %v1458 = vpack.c.bf16 %v1385, %v1381
    %v1459 = vpack.c.bf16 %v1393, %v1389
    %v1460 = vpack.c.bf16 %v1395, %v1391
    %v1461 = vpack.c.bf16 %v1403, %v1399
    %v1462 = vpack.c.bf16 %v1405, %v1401
    %v1463 = vpack.c.bf16 %v1413, %v1409
    %v1464 = vpack.c.bf16 %v1415, %v1411
    %v1465 = vpack.c.bf16 %v1423, %v1419
    %v1466 = vpack.c.bf16 %v1425, %v1421
    %v1467 = vpack.c.bf16 %v1433, %v1429
    %v1468 = vpack.c.bf16 %v1435, %v1431
    %v1469 = vpack.c.bf16 %v1443, %v1439
    %v1470 = vpack.c.bf16 %v1445, %v1441
    %v1471 = vpack.c.bf16 %v1453, %v1449
    %v1472 = vpack.c.bf16 %v1455, %v1451
    %1473 = vmatprep.subr.bf16.mxu0 %v249
    %1474 = vmatpush1.bf16.msra.mxu0 %v248
    %1475 = vmatprep.subr.bf16.mxu0 %v251
    %1476 = vmatpush1.bf16.msra.mxu0 %v250
    %1477 = vmatprep.subr.bf16.mxu0 %v253
    %1478 = vmatpush1.bf16.msra.mxu0 %v252
    %1479 = vmatprep.subr.bf16.mxu0 %v255
    %1480 = vmatpush1.bf16.msra.mxu0 %v254
    %1481 = vmatprep.subr.bf16.mxu0 %v257
    %1482 = vmatpush1.bf16.msra.mxu0 %v256
    %1483 = vmatprep.subr.bf16.mxu0 %v259
    %1484 = vmatpush1.bf16.msra.mxu0 %v258
    %1485 = vmatprep.subr.bf16.mxu0 %v261
    %1486 = vmatpush1.bf16.msra.mxu0 %v260
    %1487 = vmatprep.subr.bf16.mxu0 %v263
    %1488 = vmatpush1.bf16.msra.mxu0 %v262
    %1489 = vmatprep.subr.bf16.mxu0 %v265
    %1490 = vmatpush1.bf16.msra.mxu0 %v264
    %1491 = vmatprep.subr.bf16.mxu0 %v267
    %1492 = vmatpush1.bf16.msra.mxu0 %v266
    %1493 = vmatprep.subr.bf16.mxu0 %v269
    %1494 = vmatpush1.bf16.msra.mxu0 %v268
    %1495 = vmatprep.subr.bf16.mxu0 %v271
    %1496 = vmatpush1.bf16.msra.mxu0 %v270
    %1497 = vmatprep.subr.bf16.mxu0 %v273
    %1498 = vmatpush1.bf16.msra.mxu0 %v272
    %1499 = vmatprep.subr.bf16.mxu0 %v275
    %1500 = vmatpush1.bf16.msra.mxu0 %v274
    %1501 = vmatprep.subr.bf16.mxu0 %v277
    %1502 = vmatpush1.bf16.msra.mxu0 %v276
    %1503 = vmatprep.subr.bf16.mxu0 %v279
    %1504 = vmatpush1.bf16.msra.mxu0 %v278
    %1505 = vmatprep.mubr.bf16.mxu0 %v1458
    %1506 = vmatmul.mubr.bf16.gmra.mrb[0].mxu0 %v1457
    %v1507 = vpop.f32.mrb[0].mxu0
    %v1508 = vadd.f32 %v72, %v1507
    %v1509 = vpop.f32.mrb[0].mxu0
    %v1510 = vadd.f32 %v73, %v1509
    %v1511 = vpop.f32.mrb[0].mxu0
    %v1512 = vadd.f32 %v74, %v1511
    %v1513 = vpop.f32.mrb[0].mxu0
    %v1514 = vadd.f32 %v75, %v1513
    %1515 = vmatprep.mubr.bf16.mxu0 %v1460
    %1516 = vmatmul.mubr.bf16.gmra.mrb[0].mxu0 %v1459
    %v1517 = vpop.f32.mrb[0].mxu0
    %v1518 = vadd.f32 %v76, %v1517
    %v1519 = vpop.f32.mrb[0].mxu0
    %v1520 = vadd.f32 %v77, %v1519
    %v1521 = vpop.f32.mrb[0].mxu0
    %v1522 = vadd.f32 %v78, %v1521
    %v1523 = vpop.f32.mrb[0].mxu0
    %v1524 = vadd.f32 %v79, %v1523
    %1525 = vmatprep.mubr.bf16.mxu0 %v1462
    %1526 = vmatmul.mubr.bf16.gmra.mrb[0].mxu0 %v1461
    %v1527 = vpop.f32.mrb[0].mxu0
    %v1528 = vadd.f32 %v80, %v1527
    %v1529 = vpop.f32.mrb[0].mxu0
    %v1530 = vadd.f32 %v81, %v1529
    %v1531 = vpop.f32.mrb[0].mxu0
    %v1532 = vadd.f32 %v82, %v1531
    %v1533 = vpop.f32.mrb[0].mxu0
    %v1534 = vadd.f32 %v83, %v1533
    %1535 = vmatprep.mubr.bf16.mxu0 %v1464
    %1536 = vmatmul.mubr.bf16.gmra.mrb[0].mxu0 %v1463
    %v1537 = vpop.f32.mrb[0].mxu0
    %v1538 = vadd.f32 %v84, %v1537
    %v1539 = vpop.f32.mrb[0].mxu0
    %v1540 = vadd.f32 %v85, %v1539
    %v1541 = vpop.f32.mrb[0].mxu0
    %v1542 = vadd.f32 %v86, %v1541
    %v1543 = vpop.f32.mrb[0].mxu0
    %v1544 = vadd.f32 %v87, %v1543
    %1545 = vmatprep.mubr.bf16.mxu0 %v1466
    %1546 = vmatmul.mubr.bf16.gmra.mrb[0].mxu0 %v1465
    %v1547 = vpop.f32.mrb[0].mxu0
    %v1548 = vadd.f32 %v88, %v1547
    %v1549 = vpop.f32.mrb[0].mxu0
    %v1550 = vadd.f32 %v89, %v1549
    %v1551 = vpop.f32.mrb[0].mxu0
    %v1552 = vadd.f32 %v90, %v1551
    %v1553 = vpop.f32.mrb[0].mxu0
    %v1554 = vadd.f32 %v91, %v1553
    %1555 = vmatprep.mubr.bf16.mxu0 %v1468
    %1556 = vmatmul.mubr.bf16.gmra.mrb[0].mxu0 %v1467
    %v1557 = vpop.f32.mrb[0].mxu0
    %v1558 = vadd.f32 %v92, %v1557
    %v1559 = vpop.f32.mrb[0].mxu0
    %v1560 = vadd.f32 %v93, %v1559
    %v1561 = vpop.f32.mrb[0].mxu0
    %v1562 = vadd.f32 %v94, %v1561
    %v1563 = vpop.f32.mrb[0].mxu0
    %v1564 = vadd.f32 %v95, %v1563
    %1565 = vmatprep.mubr.bf16.mxu0 %v1470
    %1566 = vmatmul.mubr.bf16.gmra.mrb[0].mxu0 %v1469
    %v1567 = vpop.f32.mrb[0].mxu0
    %v1568 = vadd.f32 %v96, %v1567
    %v1569 = vpop.f32.mrb[0].mxu0
    %v1570 = vadd.f32 %v97, %v1569
    %v1571 = vpop.f32.mrb[0].mxu0
    %v1572 = vadd.f32 %v98, %v1571
    %v1573 = vpop.f32.mrb[0].mxu0
    %v1574 = vadd.f32 %v99, %v1573
    %1575 = vmatprep.mubr.bf16.mxu0 %v1472
    %1576 = vmatmul.mubr.bf16.gmra.mrb[0].mxu0 %v1471
    %v1577 = vpop.f32.mrb[0].mxu0
    %v1578 = vadd.f32 %v100, %v1577
    %v1579 = vpop.f32.mrb[0].mxu0
    %v1580 = vadd.f32 %v101, %v1579
    %v1581 = vpop.f32.mrb[0].mxu0
    %v1582 = vadd.f32 %v102, %v1581
    %v1583 = vpop.f32.mrb[0].mxu0
    %v1584 = vadd.f32 %v103, %v1583
    %1585 = vdwg.mxu0
    %1586 = vst [vmem:[#allocation7] sm:$0xff] %v1508
    %1587 = vst [vmem:[#allocation7 + $0x8] sm:$0xff] %v1510
    %1588 = vst [vmem:[#allocation7 + $0x10] sm:$0xff] %v1512
    %1589 = vst [vmem:[#allocation7 + $0x18] sm:$0xff] %v1514
    %1590 = vst [vmem:[#allocation7 + $0x20] sm:$0xff] %v1518
    %1591 = vst [vmem:[#allocation7 + $0x28] sm:$0xff] %v1520
    %1592 = vst [vmem:[#allocation7 + $0x30] sm:$0xff] %v1522
    %1593 = vst [vmem:[#allocation7 + $0x38] sm:$0xff] %v1524
    %1594 = vst [vmem:[#allocation7 + $0x40] sm:$0xff] %v1528
    %1595 = vst [vmem:[#allocation7 + $0x48] sm:$0xff] %v1530
    %1596 = vst [vmem:[#allocation7 + $0x50] sm:$0xff] %v1532
    %1597 = vst [vmem:[#allocation7 + $0x58] sm:$0xff] %v1534
    %1598 = vst [vmem:[#allocation7 + $0x60] sm:$0xff] %v1538
    %1599 = vst [vmem:[#allocation7 + $0x68] sm:$0xff] %v1540
    %1600 = vst [vmem:[#allocation7 + $0x70] sm:$0xff] %v1542
    %1601 = vst [vmem:[#allocation7 + $0x78] sm:$0xff] %v1544
    %1602 = vst [vmem:[#allocation7 + $0x80] sm:$0xff] %v1548
    %1603 = vst [vmem:[#allocation7 + $0x88] sm:$0xff] %v1550
    %1604 = vst [vmem:[#allocation7 + $0x90] sm:$0xff] %v1552
    %1605 = vst [vmem:[#allocation7 + $0x98] sm:$0xff] %v1554
    %1606 = vst [vmem:[#allocation7 + $0xa0] sm:$0xff] %v1558
    %1607 = vst [vmem:[#allocation7 + $0xa8] sm:$0xff] %v1560
    %1608 = vst [vmem:[#allocation7 + $0xb0] sm:$0xff] %v1562
    %1609 = vst [vmem:[#allocation7 + $0xb8] sm:$0xff] %v1564
    %1610 = vst [vmem:[#allocation7 + $0xc0] sm:$0xff] %v1568
    %1611 = vst [vmem:[#allocation7 + $0xc8] sm:$0xff] %v1570
    %1612 = vst [vmem:[#allocation7 + $0xd0] sm:$0xff] %v1572
    %1613 = vst [vmem:[#allocation7 + $0xd8] sm:$0xff] %v1574
    %1614 = vst [vmem:[#allocation7 + $0xe0] sm:$0xff] %v1578
    %1615 = vst [vmem:[#allocation7 + $0xe8] sm:$0xff] %v1580
    %1616 = vst [vmem:[#allocation7 + $0xf0] sm:$0xff] %v1582
    %1617 = vst [vmem:[#allocation7 + $0xf8] sm:$0xff] %v1584
    // Predicated region
    $region18: #{tpu_custom_call.1} parent=1 // pred_check
      _
    $region19: #{tpu_custom_call.1} parent=1 // pred_check_branch
      %1619 = sbr.rel (0) target = $region21
    $region20: #{tpu_custom_call.1} parent=1 // pred_region
      %s1621 = ssub.s32 4096, 4096
      %1622 = vsyncadd [#allocation4], %s1621
      %s1623 = sshll.u32 [#allocation7], 4
      %s1624 = int_to_ptr.vmem [resolvable:$true] %s1623
      %1629 = dma.vmem_to_hbm [thread:$0]  %s1624, 4096, %s2, [#allocation4], 256, 256, 16
    $region21: #{tpu_custom_call.1} parent=1 // pred_fallthru
      _
    // Predicated region
    $region22: #{tpu_custom_call.1} parent=1 // pred_check
      _
    $region23: #{tpu_custom_call.1} parent=1 // pred_check_branch
      %1631 = sbr.rel (0) target = $region25
    $region24: #{tpu_custom_call.1} parent=1 // pred_region
      %1632 = dma.done [#allocation4], 4096
    $region25: #{tpu_custom_call.1} parent=1 // pred_fallthru
      _
    %1633 = vsyncpa [#allocation3], 1
    %1634 = vsyncpa [#allocation6], 1
    %1635 = vsyncpa [#allocation4], 1

</llo_original>
